<compile_context>
chip_gen: v7x
topology: tpu7x:2x2x1
jax: 0.10.0
libtpu: 0.0.40
codegen_flags: <defaults>
</compile_context>

<pallas_src>
import jax
import jax.numpy as jnp
from jax.experimental import pallas as pl
from jax.experimental.pallas import tpu as pltpu

IN_DIM, H1, H2, OUT_DIM = 1024, 128, 64, 4


def domain_classifier_kernel(x_ref, w1_ref, b1_ref, w2_ref, b2_ref,
                             w3_ref, b3_ref, o_ref):
    # Layer 1 (dominant): bf16 LHS/RHS on the MXU, f32 accumulation.
    h1 = jnp.dot(x_ref[...], w1_ref[...], preferred_element_type=jnp.float32)
    h1 = jnp.maximum(h1 + b1_ref[...], 0.0)

    # Layers 2/3 are tiny; keep f32 inputs for accuracy.
    h2 = jnp.dot(h1, w2_ref[...], preferred_element_type=jnp.float32)
    h2 = jnp.maximum(h2 + b2_ref[...], 0.0)

    logits = jnp.dot(h2, w3_ref[...], preferred_element_type=jnp.float32)
    logits = logits + b3_ref[...]

    # Numerically stable log-softmax over the 4 class logits (f32).
    m = jnp.max(logits, axis=1, keepdims=True)
    shifted = logits - m
    lse = jnp.log(jnp.sum(jnp.exp(shifted), axis=1, keepdims=True))
    o_ref[...] = (shifted - lse).astype(o_ref.dtype)


def _pick_batch_tile(batch):
    # Multiple of 128 (full MXU LHS rows on v5e, aligns with the 256-wide MXU
    # on v6e/v7x).  Capped at 512 so double-buffered bf16 x-tiles stay ~2 MiB
    # (well under v7x's 32 MiB scoped VMEM) and realistic batches still give
    # >=2 parallel grid steps for the two v7x TensorCores.
    for tile in (512, 256, 128):
        if batch >= 2 * tile:
            return tile
    return 128


def domain_classifier(feature, params):
    """feature: (B, 1024) float32. params: dict of w1,b1,w2,b2,w3,b3 (f32)."""
    B = feature.shape[0]
    tile = _pick_batch_tile(B)
    B_pad = pl.cdiv(B, tile) * tile
    if B_pad != B:
        feature = jnp.pad(feature, ((0, B_pad - B), (0, 0)))

    # bf16 inputs for the dominant 1024x128 matmul; everything downstream f32.
    x_bf16 = feature.astype(jnp.bfloat16)
    w1 = params["w1"].astype(jnp.bfloat16)
    b1, w2, b2, w3, b3 = (params["b1"], params["w2"], params["b2"],
                          params["w3"], params["b3"])

    grid = (B_pad // tile,)

    cost = pl.CostEstimate(
        flops=2 * B_pad * (IN_DIM * H1 + H1 * H2 + H2 * OUT_DIM),
        transcendentals=B_pad * (OUT_DIM + 1),          # exp per class + log
        bytes_accessed=(B_pad * IN_DIM * 2              # bf16 activations in
                        + IN_DIM * H1 * 2               # bf16 w1
                        + (H1 * H2 + H2 * OUT_DIM + H1 + H2 + OUT_DIM) * 4
                        + B_pad * OUT_DIM * 4),         # f32 log-probs out
    )

    out = pl.pallas_call(
        domain_classifier_kernel,
        out_shape=jax.ShapeDtypeStruct((B_pad, OUT_DIM), jnp.float32),
        grid_spec=pltpu.PrefetchScalarGridSpec(
            num_scalar_prefetch=0,
            grid=grid,
            in_specs=[
                pl.BlockSpec((tile, IN_DIM), lambda i: (i, 0)),   # x tile
                pl.BlockSpec((IN_DIM, H1), lambda i: (0, 0)),     # w1 (bf16)
                pl.BlockSpec((1, H1), lambda i: (0, 0)),          # b1
                pl.BlockSpec((H1, H2), lambda i: (0, 0)),         # w2
                pl.BlockSpec((1, H2), lambda i: (0, 0)),          # b2
                pl.BlockSpec((H2, OUT_DIM), lambda i: (0, 0)),    # w3
                pl.BlockSpec((1, OUT_DIM), lambda i: (0, 0)),     # b3
            ],
            out_specs=pl.BlockSpec((tile, OUT_DIM), lambda i: (i, 0)),
        ),
        compiler_params=pltpu.CompilerParams(
            dimension_semantics=("parallel",),
            vmem_limit_bytes=32 * 1024 * 1024),
        cost_estimate=cost,
    )(x_bf16, w1, b1, w2, b2, w3, b3)

    return out[:B]


def init_params(key):
    """Deterministic synthetic parameters with PyTorch-Linear-like scaling."""
    ks = jax.random.split(key, 6)

    def uniform(k, shape, fan_in):
        bound = 1.0 / jnp.sqrt(fan_in)
        return jax.random.uniform(k, shape, jnp.float32, -bound, bound)

    return {
        "w1": uniform(ks[0], (IN_DIM, H1), IN_DIM),
        "b1": uniform(ks[1], (1, H1), IN_DIM),
        "w2": uniform(ks[2], (H1, H2), H1),
        "b2": uniform(ks[3], (1, H2), H1),
        "w3": uniform(ks[4], (H2, OUT_DIM), H2),
        "b3": uniform(ks[5], (1, OUT_DIM), H2),
    }


def reference_forward(feature, params):
    """Pure-JAX f32 reference of the PyTorch forward (grad_reverse = identity)."""
    h1 = jnp.maximum(feature @ params["w1"] + params["b1"], 0.0)
    h2 = jnp.maximum(h1 @ params["w2"] + params["b2"], 0.0)
    logits = h2 @ params["w3"] + params["b3"]
    return jax.nn.log_softmax(logits, axis=1)


if __name__ == "__main__":
    key = jax.random.PRNGKey(0)
    k_param, k_x = jax.random.split(key)

    params = init_params(k_param)
    B = 8  # small batch; feature dim is fixed at 1024 by the module
    feature = jax.random.normal(k_x, (B, IN_DIM), jnp.float32)

    out = domain_classifier(feature, params)
    out = jax.block_until_ready(out)

    ref = reference_forward(feature, params)
    assert out.shape == (B, OUT_DIM)
    # Tolerance relaxed for the bf16 layer-1 inputs (f32 accumulation kept).
    assert jnp.allclose(out, ref, atol=3e-2, rtol=3e-2), "mismatch vs reference"

    print("KERNEL_OK")
</pallas_src>

<mosaic_0001>
module attributes {stable_mosaic.version = 11 : i64} {
  func.func @domain_classifier_kernel(%arg0: i32, %arg1: memref<128x1024xbf16, #tpu.memory_space<vmem>>, %arg2: memref<1024x128xbf16, #tpu.memory_space<vmem>>, %arg3: memref<1x128xf32, #tpu.memory_space<vmem>>, %arg4: memref<128x64xf32, #tpu.memory_space<vmem>>, %arg5: memref<1x64xf32, #tpu.memory_space<vmem>>, %arg6: memref<64x4xf32, #tpu.memory_space<vmem>>, %arg7: memref<1x4xf32, #tpu.memory_space<vmem>>, %arg8: memref<128x4xf32, #tpu.memory_space<vmem>>) attributes {dimension_semantics = [#tpu.dimension_semantics<parallel>], iteration_bounds = array<i64: 1>, scalar_prefetch = 0 : i64, scratch_operands = 0 : i64, tpu.core_type = #tpu.core_type<tc>, window_params = [{transform_indices = @transform_0, window_bounds = array<i64: 128, 1024>}, {pipeline_mode = #tpu.pipeline_mode<synchronous>, transform_indices = @transform_1, window_bounds = array<i64: 1024, 128>}, {pipeline_mode = #tpu.pipeline_mode<synchronous>, transform_indices = @transform_2, window_bounds = array<i64: 1, 128>}, {pipeline_mode = #tpu.pipeline_mode<synchronous>, transform_indices = @transform_3, window_bounds = array<i64: 128, 64>}, {pipeline_mode = #tpu.pipeline_mode<synchronous>, transform_indices = @transform_4, window_bounds = array<i64: 1, 64>}, {pipeline_mode = #tpu.pipeline_mode<synchronous>, transform_indices = @transform_5, window_bounds = array<i64: 64, 4>}, {pipeline_mode = #tpu.pipeline_mode<synchronous>, transform_indices = @transform_6, window_bounds = array<i64: 1, 4>}, {transform_indices = @transform_7, window_bounds = array<i64: 128, 4>}]} {
    %c0 = arith.constant 0 : index
    %c0_0 = arith.constant 0 : index
    %0 = vector.load %arg1[%c0, %c0_0] : memref<128x1024xbf16, #tpu.memory_space<vmem>>, vector<128x1024xbf16>
    %c0_1 = arith.constant 0 : index
    %c0_2 = arith.constant 0 : index
    %1 = vector.load %arg2[%c0_1, %c0_2] : memref<1024x128xbf16, #tpu.memory_space<vmem>>, vector<1024x128xbf16>
    %cst = arith.constant dense<0.000000e+00> : vector<128x128xf32>
    %2 = tpu.matmul %0, %1, %cst {dimension_numbers = #tpu.dot_dimension_numbers<[1], [0], [0], [1], [0, 0, 1, 1], [], []>} : vector<128x1024xbf16>, vector<1024x128xbf16>, vector<128x128xf32> -> vector<128x128xf32>
    %c0_3 = arith.constant 0 : index
    %c0_4 = arith.constant 0 : index
    %3 = vector.load %arg3[%c0_3, %c0_4] : memref<1x128xf32, #tpu.memory_space<vmem>>, vector<1x128xf32>
    %4 = vector.broadcast %3 : vector<1x128xf32> to vector<128x128xf32>
    %5 = arith.addf %2, %4 : vector<128x128xf32>
    %cst_5 = arith.constant 0.000000e+00 : f32
    %6 = vector.broadcast %cst_5 : f32 to vector<128x128xf32>
    %7 = arith.maximumf %5, %6 : vector<128x128xf32>
    %c0_6 = arith.constant 0 : index
    %c0_7 = arith.constant 0 : index
    %8 = vector.load %arg4[%c0_6, %c0_7] : memref<128x64xf32, #tpu.memory_space<vmem>>, vector<128x64xf32>
    %cst_8 = arith.constant dense<0.000000e+00> : vector<128x64xf32>
    %9 = tpu.matmul %7, %8, %cst_8 {dimension_numbers = #tpu.dot_dimension_numbers<[1], [0], [0], [1], [0, 0, 1, 1], [], []>} : vector<128x128xf32>, vector<128x64xf32>, vector<128x64xf32> -> vector<128x64xf32>
    %c0_9 = arith.constant 0 : index
    %c0_10 = arith.constant 0 : index
    %10 = vector.load %arg5[%c0_9, %c0_10] : memref<1x64xf32, #tpu.memory_space<vmem>>, vector<1x64xf32>
    %11 = vector.broadcast %10 : vector<1x64xf32> to vector<128x64xf32>
    %12 = arith.addf %9, %11 : vector<128x64xf32>
    %cst_11 = arith.constant 0.000000e+00 : f32
    %13 = vector.broadcast %cst_11 : f32 to vector<128x64xf32>
    %14 = arith.maximumf %12, %13 : vector<128x64xf32>
    %c0_12 = arith.constant 0 : index
    %c0_13 = arith.constant 0 : index
    %15 = vector.load %arg6[%c0_12, %c0_13] : memref<64x4xf32, #tpu.memory_space<vmem>>, vector<64x4xf32>
    %cst_14 = arith.constant dense<0.000000e+00> : vector<128x4xf32>
    %16 = tpu.matmul %14, %15, %cst_14 {dimension_numbers = #tpu.dot_dimension_numbers<[1], [0], [0], [1], [0, 0, 1, 1], [], []>} : vector<128x64xf32>, vector<64x4xf32>, vector<128x4xf32> -> vector<128x4xf32>
    %c0_15 = arith.constant 0 : index
    %c0_16 = arith.constant 0 : index
    %17 = vector.load %arg7[%c0_15, %c0_16] : memref<1x4xf32, #tpu.memory_space<vmem>>, vector<1x4xf32>
    %18 = vector.broadcast %17 : vector<1x4xf32> to vector<128x4xf32>
    %19 = arith.addf %16, %18 : vector<128x4xf32>
    %cst_17 = arith.constant dense<0xFF800000> : vector<128xf32>
    %20 = vector.multi_reduction <maximumf>, %19, %cst_17 [1] : vector<128x4xf32> to vector<128xf32>
    %21 = vector.shape_cast %20 : vector<128xf32> to vector<128x1xf32>
    %22 = vector.broadcast %21 : vector<128x1xf32> to vector<128x4xf32>
    %23 = arith.subf %19, %22 : vector<128x4xf32>
    %24 = math.exp %23 : vector<128x4xf32>
    %cst_18 = arith.constant dense<0.000000e+00> : vector<128xf32>
    %25 = vector.multi_reduction <add>, %24, %cst_18 [1] : vector<128x4xf32> to vector<128xf32>
    %26 = vector.shape_cast %25 : vector<128xf32> to vector<128x1xf32>
    %27 = math.log %26 : vector<128x1xf32>
    %28 = vector.broadcast %27 : vector<128x1xf32> to vector<128x4xf32>
    %29 = arith.subf %23, %28 : vector<128x4xf32>
    %c0_19 = arith.constant 0 : index
    %c0_20 = arith.constant 0 : index
    %30 = vector.load %arg8[%c0_19, %c0_20] : memref<128x4xf32, #tpu.memory_space<vmem>>, vector<128x4xf32>
    tpu.vector_store %arg8[%c0_19, %c0_20], %29 {strides = array<i32>} : memref<128x4xf32, #tpu.memory_space<vmem>>, vector<128x4xf32>,
    return
  }
  func.func @transform_0(%arg0: i32) -> (i32, i32) {
    %c0_i32 = arith.constant 0 : i32
    %c0_i32_0 = arith.constant 0 : i32
    return %arg0, %c0_i32 : i32, i32
  }
  func.func @transform_1(%arg0: i32) -> (i32, i32) {
    %c0_i32 = arith.constant 0 : i32
    %c0_i32_0 = arith.constant 0 : i32
    %c0_i32_1 = arith.constant 0 : i32
    return %c0_i32, %c0_i32_0 : i32, i32
  }
  func.func @transform_2(%arg0: i32) -> (i32, i32) {
    %c0_i32 = arith.constant 0 : i32
    %c0_i32_0 = arith.constant 0 : i32
    %c0_i32_1 = arith.constant 0 : i32
    return %c0_i32, %c0_i32_0 : i32, i32
  }
  func.func @transform_3(%arg0: i32) -> (i32, i32) {
    %c0_i32 = arith.constant 0 : i32
    %c0_i32_0 = arith.constant 0 : i32
    %c0_i32_1 = arith.constant 0 : i32
    return %c0_i32, %c0_i32_0 : i32, i32
  }
  func.func @transform_4(%arg0: i32) -> (i32, i32) {
    %c0_i32 = arith.constant 0 : i32
    %c0_i32_0 = arith.constant 0 : i32
    %c0_i32_1 = arith.constant 0 : i32
    return %c0_i32, %c0_i32_0 : i32, i32
  }
  func.func @transform_5(%arg0: i32) -> (i32, i32) {
    %c0_i32 = arith.constant 0 : i32
    %c0_i32_0 = arith.constant 0 : i32
    %c0_i32_1 = arith.constant 0 : i32
    return %c0_i32, %c0_i32_0 : i32, i32
  }
  func.func @transform_6(%arg0: i32) -> (i32, i32) {
    %c0_i32 = arith.constant 0 : i32
    %c0_i32_0 = arith.constant 0 : i32
    %c0_i32_1 = arith.constant 0 : i32
    return %c0_i32, %c0_i32_0 : i32, i32
  }
  func.func @transform_7(%arg0: i32) -> (i32, i32) {
    %c0_i32 = arith.constant 0 : i32
    %c0_i32_0 = arith.constant 0 : i32
    return %arg0, %c0_i32 : i32, i32
  }
}

</mosaic_0001>

<llo_original>
// kernel: tpu_custom_call.1
$region0: #{tpu_custom_call.1}
  #allocation0 [shape = 'u32[]', space=smem, size = 0x4, offset = 0x4, fixed_abs, tag = 'smem constant byte address 0x4 - core index']
  #allocation1 [shape = 'u32[144,128]{1,0:T(1,128)}', space=vmem, size = 0x12000, scoped, tag = 'internal scratch']
  %s0 = inlined_call_operand.hbm [shape: bf16[128,1024], index: 0, kind: input, shape index: {}]
  %s1 = inlined_call_operand.hbm [shape: bf16[1024,128], index: 1, kind: input, shape index: {}]
  %s2 = inlined_call_operand.vmem [shape: f32[1,128], index: 2, kind: input, shape index: {}]
  %s3 = inlined_call_operand.vmem [shape: f32[128,64], index: 3, kind: input, shape index: {}]
  %s4 = inlined_call_operand.vmem [shape: f32[1,64], index: 4, kind: input, shape index: {}]
  %s5 = inlined_call_operand.vmem [shape: f32[64,4], index: 5, kind: input, shape index: {}]
  %s6 = inlined_call_operand.vmem [shape: f32[1,4], index: 6, kind: input, shape index: {}]
  %s7 = inlined_call_operand.vmem [shape: f32[128,4], index: 7, kind: output, shape index: {}]
  %s8 = sld [smem:[#allocation0]]
  $region46: #{tpu_custom_call.1} parent=0
    _
  %s10 = ssub.s32 1, %s8
  %s11 = scalar_select 0, %s10, %s8
  $region1: #{tpu_custom_call.1} parent=0
    #allocation2 [shape = 'u8[262144]{0}', space=vmem, size = 0x40000, scoped, tag = 'input window, operand 0, single buffered']
    #allocation3 [shape = 's32[1]{0}', space=sflag, size = 0x4, scoped, tag = 'scoped memory for tpu_custom_call.1']
    #allocation4 [shape = 'u8[262144]{0}', space=vmem, size = 0x40000, scoped, tag = 'input window, operand 1, single buffered']
    #allocation5 [shape = 's32[1]{0}', space=sflag, size = 0x4, scoped, tag = 'scoped memory for tpu_custom_call.1']
    %12 = vsyncpa [#allocation3], 0
    %13 = vsyncpa [#allocation5], 0
    // Predicated region
    $region2: #{tpu_custom_call.1} parent=1 // pred_check
      _
    $region3: #{tpu_custom_call.1} parent=1 // pred_check_branch
      %15 = sbr.rel (0) target = $region5
    $region4: #{tpu_custom_call.1} parent=1 // pred_region
      %s17 = ssub.s32 8192, 8192
      %18 = vsyncadd [#allocation3], %s17
      %s19 = sshll.u32 [#allocation2], 4
      %s20 = int_to_ptr.vmem [resolvable:$true] %s19
      %25 = dma.hbm_to_vmem [thread:$0]  %s0, 8192, %s20, [#allocation3], 512, 512, 32
    $region5: #{tpu_custom_call.1} parent=1 // pred_fallthru
      _
    // Predicated region
    $region6: #{tpu_custom_call.1} parent=1 // pred_check
      _
    $region7: #{tpu_custom_call.1} parent=1 // pred_check_branch
      %27 = sbr.rel (0) target = $region9
    $region8: #{tpu_custom_call.1} parent=1 // pred_region
      %s29 = ssub.s32 8192, 8192
      %30 = vsyncadd [#allocation5], %s29
      %s31 = sshll.u32 [#allocation4], 4
      %s32 = int_to_ptr.vmem [resolvable:$true] %s31
      %37 = dma.hbm_to_vmem [thread:$0]  %s1, 8192, %s32, [#allocation5], 64, 64, 4
    $region9: #{tpu_custom_call.1} parent=1 // pred_fallthru
      _
    // Predicated region
    $region10: #{tpu_custom_call.1} parent=1 // pred_check
      _
    $region11: #{tpu_custom_call.1} parent=1 // pred_check_branch
      %39 = sbr.rel (0) target = $region13
    $region12: #{tpu_custom_call.1} parent=1 // pred_region
      _
    $region13: #{tpu_custom_call.1} parent=1 // pred_fallthru
      _
    // Predicated region
    $region14: #{tpu_custom_call.1} parent=1 // pred_check
      _
    $region15: #{tpu_custom_call.1} parent=1 // pred_check_branch
      %41 = sbr.rel (0) target = $region17
    $region16: #{tpu_custom_call.1} parent=1 // pred_region
      _
    $region17: #{tpu_custom_call.1} parent=1 // pred_fallthru
      _
    // Predicated region
    $region18: #{tpu_custom_call.1} parent=1 // pred_check
      _
    $region19: #{tpu_custom_call.1} parent=1 // pred_check_branch
      %43 = sbr.rel (0) target = $region21
    $region20: #{tpu_custom_call.1} parent=1 // pred_region
      _
    $region21: #{tpu_custom_call.1} parent=1 // pred_fallthru
      _
    // Predicated region
    $region22: #{tpu_custom_call.1} parent=1 // pred_check
      _
    $region23: #{tpu_custom_call.1} parent=1 // pred_check_branch
      %45 = sbr.rel (0) target = $region25
    $region24: #{tpu_custom_call.1} parent=1 // pred_region
      _
    $region25: #{tpu_custom_call.1} parent=1 // pred_fallthru
      _
    // Predicated region
    $region26: #{tpu_custom_call.1} parent=1 // pred_check
      _
    $region27: #{tpu_custom_call.1} parent=1 // pred_check_branch
      %47 = sbr.rel (0) target = $region29
    $region28: #{tpu_custom_call.1} parent=1 // pred_region
      _
    $region29: #{tpu_custom_call.1} parent=1 // pred_fallthru
      _
    // Predicated region
    $region30: #{tpu_custom_call.1} parent=1 // pred_check
      _
    $region31: #{tpu_custom_call.1} parent=1 // pred_check_branch
      %49 = sbr.rel (0) target = $region33
    $region32: #{tpu_custom_call.1} parent=1 // pred_region
      %50 = dma.done [#allocation3], 8192
    $region33: #{tpu_custom_call.1} parent=1 // pred_fallthru
      _
    // Predicated region
    $region34: #{tpu_custom_call.1} parent=1 // pred_check
      _
    $region35: #{tpu_custom_call.1} parent=1 // pred_check_branch
      %52 = sbr.rel (0) target = $region37
    $region36: #{tpu_custom_call.1} parent=1 // pred_region
      %53 = dma.done [#allocation5], 8192
    $region37: #{tpu_custom_call.1} parent=1 // pred_fallthru
      _
    %v55 = vld [vmem:[#allocation2] sm:$0xff]
    %v56 = vld [vmem:[#allocation2 + $0x8] sm:$0xff]
    %v57 = vld [vmem:[#allocation2 + $0x10] sm:$0xff]
    %v58 = vld [vmem:[#allocation2 + $0x18] sm:$0xff]
    %v59 = vld [vmem:[#allocation2 + $0x20] sm:$0xff]
    %v60 = vld [vmem:[#allocation2 + $0x28] sm:$0xff]
    %v61 = vld [vmem:[#allocation2 + $0x30] sm:$0xff]
    %v62 = vld [vmem:[#allocation2 + $0x38] sm:$0xff]
    %v63 = vld [vmem:[#allocation2 + $0x40] sm:$0xff]
    %v64 = vld [vmem:[#allocation2 + $0x48] sm:$0xff]
    %v65 = vld [vmem:[#allocation2 + $0x50] sm:$0xff]
    %v66 = vld [vmem:[#allocation2 + $0x58] sm:$0xff]
    %v67 = vld [vmem:[#allocation2 + $0x60] sm:$0xff]
    %v68 = vld [vmem:[#allocation2 + $0x68] sm:$0xff]
    %v69 = vld [vmem:[#allocation2 + $0x70] sm:$0xff]
    %v70 = vld [vmem:[#allocation2 + $0x78] sm:$0xff]
    %v71 = vld [vmem:[#allocation2 + $0x80] sm:$0xff]
    %v72 = vld [vmem:[#allocation2 + $0x88] sm:$0xff]
    %v73 = vld [vmem:[#allocation2 + $0x90] sm:$0xff]
    %v74 = vld [vmem:[#allocation2 + $0x98] sm:$0xff]
    %v75 = vld [vmem:[#allocation2 + $0xa0] sm:$0xff]
    %v76 = vld [vmem:[#allocation2 + $0xa8] sm:$0xff]
    %v77 = vld [vmem:[#allocation2 + $0xb0] sm:$0xff]
    %v78 = vld [vmem:[#allocation2 + $0xb8] sm:$0xff]
    %v79 = vld [vmem:[#allocation2 + $0xc0] sm:$0xff]
    %v80 = vld [vmem:[#allocation2 + $0xc8] sm:$0xff]
    %v81 = vld [vmem:[#allocation2 + $0xd0] sm:$0xff]
    %v82 = vld [vmem:[#allocation2 + $0xd8] sm:$0xff]
    %v83 = vld [vmem:[#allocation2 + $0xe0] sm:$0xff]
    %v84 = vld [vmem:[#allocation2 + $0xe8] sm:$0xff]
    %v85 = vld [vmem:[#allocation2 + $0xf0] sm:$0xff]
    %v86 = vld [vmem:[#allocation2 + $0xf8] sm:$0xff]
    %v87 = vld [vmem:[#allocation2 + $0x100] sm:$0xff]
    %v88 = vld [vmem:[#allocation2 + $0x108] sm:$0xff]
    %v89 = vld [vmem:[#allocation2 + $0x110] sm:$0xff]
    %v90 = vld [vmem:[#allocation2 + $0x118] sm:$0xff]
    %v91 = vld [vmem:[#allocation2 + $0x120] sm:$0xff]
    %v92 = vld [vmem:[#allocation2 + $0x128] sm:$0xff]
    %v93 = vld [vmem:[#allocation2 + $0x130] sm:$0xff]
    %v94 = vld [vmem:[#allocation2 + $0x138] sm:$0xff]
    %v95 = vld [vmem:[#allocation2 + $0x140] sm:$0xff]
    %v96 = vld [vmem:[#allocation2 + $0x148] sm:$0xff]
    %v97 = vld [vmem:[#allocation2 + $0x150] sm:$0xff]
    %v98 = vld [vmem:[#allocation2 + $0x158] sm:$0xff]
    %v99 = vld [vmem:[#allocation2 + $0x160] sm:$0xff]
    %v100 = vld [vmem:[#allocation2 + $0x168] sm:$0xff]
    %v101 = vld [vmem:[#allocation2 + $0x170] sm:$0xff]
    %v102 = vld [vmem:[#allocation2 + $0x178] sm:$0xff]
    %v103 = vld [vmem:[#allocation2 + $0x180] sm:$0xff]
    %v104 = vld [vmem:[#allocation2 + $0x188] sm:$0xff]
    %v105 = vld [vmem:[#allocation2 + $0x190] sm:$0xff]
    %v106 = vld [vmem:[#allocation2 + $0x198] sm:$0xff]
    %v107 = vld [vmem:[#allocation2 + $0x1a0] sm:$0xff]
    %v108 = vld [vmem:[#allocation2 + $0x1a8] sm:$0xff]
    %v109 = vld [vmem:[#allocation2 + $0x1b0] sm:$0xff]
    %v110 = vld [vmem:[#allocation2 + $0x1b8] sm:$0xff]
    %v111 = vld [vmem:[#allocation2 + $0x1c0] sm:$0xff]
    %v112 = vld [vmem:[#allocation2 + $0x1c8] sm:$0xff]
    %v113 = vld [vmem:[#allocation2 + $0x1d0] sm:$0xff]
    %v114 = vld [vmem:[#allocation2 + $0x1d8] sm:$0xff]
    %v115 = vld [vmem:[#allocation2 + $0x1e0] sm:$0xff]
    %v116 = vld [vmem:[#allocation2 + $0x1e8] sm:$0xff]
    %v117 = vld [vmem:[#allocation2 + $0x1f0] sm:$0xff]
    %v118 = vld [vmem:[#allocation2 + $0x1f8] sm:$0xff]
    %v119 = vld [vmem:[#allocation4] sm:$0xf]
    %v120 = vld [vmem:[#allocation4 + $0x4] sm:$0xf]
    %v121 = vld [vmem:[#allocation4 + $0x8] sm:$0xf]
    %v122 = vld [vmem:[#allocation4 + $0xc] sm:$0xf]
    %v123 = vld [vmem:[#allocation4 + $0x10] sm:$0xf]
    %v124 = vld [vmem:[#allocation4 + $0x14] sm:$0xf]
    %v125 = vld [vmem:[#allocation4 + $0x18] sm:$0xf]
    %v126 = vld [vmem:[#allocation4 + $0x1c] sm:$0xf]
    %v127 = vld [vmem:[#allocation4 + $0x20] sm:$0xf]
    %v128 = vld [vmem:[#allocation4 + $0x24] sm:$0xf]
    %v129 = vld [vmem:[#allocation4 + $0x28] sm:$0xf]
    %v130 = vld [vmem:[#allocation4 + $0x2c] sm:$0xf]
    %v131 = vld [vmem:[#allocation4 + $0x30] sm:$0xf]
    %v132 = vld [vmem:[#allocation4 + $0x34] sm:$0xf]
    %v133 = vld [vmem:[#allocation4 + $0x38] sm:$0xf]
    %v134 = vld [vmem:[#allocation4 + $0x3c] sm:$0xf]
    %v135 = vld [vmem:[#allocation4 + $0x40] sm:$0xf]
    %v136 = vld [vmem:[#allocation4 + $0x44] sm:$0xf]
    %v137 = vld [vmem:[#allocation4 + $0x48] sm:$0xf]
    %v138 = vld [vmem:[#allocation4 + $0x4c] sm:$0xf]
    %v139 = vld [vmem:[#allocation4 + $0x50] sm:$0xf]
    %v140 = vld [vmem:[#allocation4 + $0x54] sm:$0xf]
    %v141 = vld [vmem:[#allocation4 + $0x58] sm:$0xf]
    %v142 = vld [vmem:[#allocation4 + $0x5c] sm:$0xf]
    %v143 = vld [vmem:[#allocation4 + $0x60] sm:$0xf]
    %v144 = vld [vmem:[#allocation4 + $0x64] sm:$0xf]
    %v145 = vld [vmem:[#allocation4 + $0x68] sm:$0xf]
    %v146 = vld [vmem:[#allocation4 + $0x6c] sm:$0xf]
    %v147 = vld [vmem:[#allocation4 + $0x70] sm:$0xf]
    %v148 = vld [vmem:[#allocation4 + $0x74] sm:$0xf]
    %v149 = vld [vmem:[#allocation4 + $0x78] sm:$0xf]
    %v150 = vld [vmem:[#allocation4 + $0x7c] sm:$0xf]
    %v151 = vld [vmem:[#allocation4 + $0x80] sm:$0xf]
    %v152 = vld [vmem:[#allocation4 + $0x84] sm:$0xf]
    %v153 = vld [vmem:[#allocation4 + $0x88] sm:$0xf]
    %v154 = vld [vmem:[#allocation4 + $0x8c] sm:$0xf]
    %v155 = vld [vmem:[#allocation4 + $0x90] sm:$0xf]
    %v156 = vld [vmem:[#allocation4 + $0x94] sm:$0xf]
    %v157 = vld [vmem:[#allocation4 + $0x98] sm:$0xf]
    %v158 = vld [vmem:[#allocation4 + $0x9c] sm:$0xf]
    %v159 = vld [vmem:[#allocation4 + $0xa0] sm:$0xf]
    %v160 = vld [vmem:[#allocation4 + $0xa4] sm:$0xf]
    %v161 = vld [vmem:[#allocation4 + $0xa8] sm:$0xf]
    %v162 = vld [vmem:[#allocation4 + $0xac] sm:$0xf]
    %v163 = vld [vmem:[#allocation4 + $0xb0] sm:$0xf]
    %v164 = vld [vmem:[#allocation4 + $0xb4] sm:$0xf]
    %v165 = vld [vmem:[#allocation4 + $0xb8] sm:$0xf]
    %v166 = vld [vmem:[#allocation4 + $0xbc] sm:$0xf]
    %v167 = vld [vmem:[#allocation4 + $0xc0] sm:$0xf]
    %v168 = vld [vmem:[#allocation4 + $0xc4] sm:$0xf]
    %v169 = vld [vmem:[#allocation4 + $0xc8] sm:$0xf]
    %v170 = vld [vmem:[#allocation4 + $0xcc] sm:$0xf]
    %v171 = vld [vmem:[#allocation4 + $0xd0] sm:$0xf]
    %v172 = vld [vmem:[#allocation4 + $0xd4] sm:$0xf]
    %v173 = vld [vmem:[#allocation4 + $0xd8] sm:$0xf]
    %v174 = vld [vmem:[#allocation4 + $0xdc] sm:$0xf]
    %v175 = vld [vmem:[#allocation4 + $0xe0] sm:$0xf]
    %v176 = vld [vmem:[#allocation4 + $0xe4] sm:$0xf]
    %v177 = vld [vmem:[#allocation4 + $0xe8] sm:$0xf]
    %v178 = vld [vmem:[#allocation4 + $0xec] sm:$0xf]
    %v179 = vld [vmem:[#allocation4 + $0xf0] sm:$0xf]
    %v180 = vld [vmem:[#allocation4 + $0xf4] sm:$0xf]
    %v181 = vld [vmem:[#allocation4 + $0xf8] sm:$0xf]
    %v182 = vld [vmem:[#allocation4 + $0xfc] sm:$0xf]
    %v183 = vld [vmem:[#allocation4 + $0x100] sm:$0xf]
    %v184 = vld [vmem:[#allocation4 + $0x104] sm:$0xf]
    %v185 = vld [vmem:[#allocation4 + $0x108] sm:$0xf]
    %v186 = vld [vmem:[#allocation4 + $0x10c] sm:$0xf]
    %v187 = vld [vmem:[#allocation4 + $0x110] sm:$0xf]
    %v188 = vld [vmem:[#allocation4 + $0x114] sm:$0xf]
    %v189 = vld [vmem:[#allocation4 + $0x118] sm:$0xf]
    %v190 = vld [vmem:[#allocation4 + $0x11c] sm:$0xf]
    %v191 = vld [vmem:[#allocation4 + $0x120] sm:$0xf]
    %v192 = vld [vmem:[#allocation4 + $0x124] sm:$0xf]
    %v193 = vld [vmem:[#allocation4 + $0x128] sm:$0xf]
    %v194 = vld [vmem:[#allocation4 + $0x12c] sm:$0xf]
    %v195 = vld [vmem:[#allocation4 + $0x130] sm:$0xf]
    %v196 = vld [vmem:[#allocation4 + $0x134] sm:$0xf]
    %v197 = vld [vmem:[#allocation4 + $0x138] sm:$0xf]
    %v198 = vld [vmem:[#allocation4 + $0x13c] sm:$0xf]
    %v199 = vld [vmem:[#allocation4 + $0x140] sm:$0xf]
    %v200 = vld [vmem:[#allocation4 + $0x144] sm:$0xf]
    %v201 = vld [vmem:[#allocation4 + $0x148] sm:$0xf]
    %v202 = vld [vmem:[#allocation4 + $0x14c] sm:$0xf]
    %v203 = vld [vmem:[#allocation4 + $0x150] sm:$0xf]
    %v204 = vld [vmem:[#allocation4 + $0x154] sm:$0xf]
    %v205 = vld [vmem:[#allocation4 + $0x158] sm:$0xf]
    %v206 = vld [vmem:[#allocation4 + $0x15c] sm:$0xf]
    %v207 = vld [vmem:[#allocation4 + $0x160] sm:$0xf]
    %v208 = vld [vmem:[#allocation4 + $0x164] sm:$0xf]
    %v209 = vld [vmem:[#allocation4 + $0x168] sm:$0xf]
    %v210 = vld [vmem:[#allocation4 + $0x16c] sm:$0xf]
    %v211 = vld [vmem:[#allocation4 + $0x170] sm:$0xf]
    %v212 = vld [vmem:[#allocation4 + $0x174] sm:$0xf]
    %v213 = vld [vmem:[#allocation4 + $0x178] sm:$0xf]
    %v214 = vld [vmem:[#allocation4 + $0x17c] sm:$0xf]
    %v215 = vld [vmem:[#allocation4 + $0x180] sm:$0xf]
    %v216 = vld [vmem:[#allocation4 + $0x184] sm:$0xf]
    %v217 = vld [vmem:[#allocation4 + $0x188] sm:$0xf]
    %v218 = vld [vmem:[#allocation4 + $0x18c] sm:$0xf]
    %v219 = vld [vmem:[#allocation4 + $0x190] sm:$0xf]
    %v220 = vld [vmem:[#allocation4 + $0x194] sm:$0xf]
    %v221 = vld [vmem:[#allocation4 + $0x198] sm:$0xf]
    %v222 = vld [vmem:[#allocation4 + $0x19c] sm:$0xf]
    %v223 = vld [vmem:[#allocation4 + $0x1a0] sm:$0xf]
    %v224 = vld [vmem:[#allocation4 + $0x1a4] sm:$0xf]
    %v225 = vld [vmem:[#allocation4 + $0x1a8] sm:$0xf]
    %v226 = vld [vmem:[#allocation4 + $0x1ac] sm:$0xf]
    %v227 = vld [vmem:[#allocation4 + $0x1b0] sm:$0xf]
    %v228 = vld [vmem:[#allocation4 + $0x1b4] sm:$0xf]
    %v229 = vld [vmem:[#allocation4 + $0x1b8] sm:$0xf]
    %v230 = vld [vmem:[#allocation4 + $0x1bc] sm:$0xf]
    %v231 = vld [vmem:[#allocation4 + $0x1c0] sm:$0xf]
    %v232 = vld [vmem:[#allocation4 + $0x1c4] sm:$0xf]
    %v233 = vld [vmem:[#allocation4 + $0x1c8] sm:$0xf]
    %v234 = vld [vmem:[#allocation4 + $0x1cc] sm:$0xf]
    %v235 = vld [vmem:[#allocation4 + $0x1d0] sm:$0xf]
    %v236 = vld [vmem:[#allocation4 + $0x1d4] sm:$0xf]
    %v237 = vld [vmem:[#allocation4 + $0x1d8] sm:$0xf]
    %v238 = vld [vmem:[#allocation4 + $0x1dc] sm:$0xf]
    %v239 = vld [vmem:[#allocation4 + $0x1e0] sm:$0xf]
    %v240 = vld [vmem:[#allocation4 + $0x1e4] sm:$0xf]
    %v241 = vld [vmem:[#allocation4 + $0x1e8] sm:$0xf]
    %v242 = vld [vmem:[#allocation4 + $0x1ec] sm:$0xf]
    %v243 = vld [vmem:[#allocation4 + $0x1f0] sm:$0xf]
    %v244 = vld [vmem:[#allocation4 + $0x1f4] sm:$0xf]
    %v245 = vld [vmem:[#allocation4 + $0x1f8] sm:$0xf]
    %v246 = vld [vmem:[#allocation4 + $0x1fc] sm:$0xf]
    %v247 = vld [vmem:[%s2] sm:$0x1]
    %v249 = vlaneseq
    %v250 = vshrl.u32 %v249, 7
    %v251 = vsub.s32 0, %v250
    %v252 = vrot.slane %v247, %v251
    %v318 = vunpack.c.l.b16 %v55
    %v319 = vunpack.c.h.b16 %v55
    %v320 = vunpack.c.l.b16 %v56
    %v321 = vunpack.c.h.b16 %v56
    %v322 = vunpack.c.l.b16 %v57
    %v323 = vunpack.c.h.b16 %v57
    %v324 = vunpack.c.l.b16 %v58
    %v325 = vunpack.c.h.b16 %v58
    %v326 = vunpack.c.l.b16 %v59
    %v327 = vunpack.c.h.b16 %v59
    %v328 = vunpack.c.l.b16 %v60
    %v329 = vunpack.c.h.b16 %v60
    %v330 = vunpack.c.l.b16 %v61
    %v331 = vunpack.c.h.b16 %v61
    %v332 = vunpack.c.l.b16 %v62
    %v333 = vunpack.c.h.b16 %v62
    %v334 = vunpack.c.l.b16 %v63
    %v335 = vunpack.c.h.b16 %v63
    %v336 = vunpack.c.l.b16 %v64
    %v337 = vunpack.c.h.b16 %v64
    %v338 = vunpack.c.l.b16 %v65
    %v339 = vunpack.c.h.b16 %v65
    %v340 = vunpack.c.l.b16 %v66
    %v341 = vunpack.c.h.b16 %v66
    %v342 = vunpack.c.l.b16 %v67
    %v343 = vunpack.c.h.b16 %v67
    %v344 = vunpack.c.l.b16 %v68
    %v345 = vunpack.c.h.b16 %v68
    %v346 = vunpack.c.l.b16 %v69
    %v347 = vunpack.c.h.b16 %v69
    %v348 = vunpack.c.l.b16 %v70
    %v349 = vunpack.c.h.b16 %v70
    %v350 = vunpack.c.l.b16 %v71
    %v351 = vunpack.c.h.b16 %v71
    %v352 = vunpack.c.l.b16 %v72
    %v353 = vunpack.c.h.b16 %v72
    %v354 = vunpack.c.l.b16 %v73
    %v355 = vunpack.c.h.b16 %v73
    %v356 = vunpack.c.l.b16 %v74
    %v357 = vunpack.c.h.b16 %v74
    %v358 = vunpack.c.l.b16 %v75
    %v359 = vunpack.c.h.b16 %v75
    %v360 = vunpack.c.l.b16 %v76
    %v361 = vunpack.c.h.b16 %v76
    %v362 = vunpack.c.l.b16 %v77
    %v363 = vunpack.c.h.b16 %v77
    %v364 = vunpack.c.l.b16 %v78
    %v365 = vunpack.c.h.b16 %v78
    %v366 = vunpack.c.l.b16 %v79
    %v367 = vunpack.c.h.b16 %v79
    %v368 = vunpack.c.l.b16 %v80
    %v369 = vunpack.c.h.b16 %v80
    %v370 = vunpack.c.l.b16 %v81
    %v371 = vunpack.c.h.b16 %v81
    %v372 = vunpack.c.l.b16 %v82
    %v373 = vunpack.c.h.b16 %v82
    %v374 = vunpack.c.l.b16 %v83
    %v375 = vunpack.c.h.b16 %v83
    %v376 = vunpack.c.l.b16 %v84
    %v377 = vunpack.c.h.b16 %v84
    %v378 = vunpack.c.l.b16 %v85
    %v379 = vunpack.c.h.b16 %v85
    %v380 = vunpack.c.l.b16 %v86
    %v381 = vunpack.c.h.b16 %v86
    %v382 = vunpack.c.l.b16 %v87
    %v383 = vunpack.c.h.b16 %v87
    %v384 = vunpack.c.l.b16 %v88
    %v385 = vunpack.c.h.b16 %v88
    %v386 = vunpack.c.l.b16 %v89
    %v387 = vunpack.c.h.b16 %v89
    %v388 = vunpack.c.l.b16 %v90
    %v389 = vunpack.c.h.b16 %v90
    %v390 = vunpack.c.l.b16 %v91
    %v391 = vunpack.c.h.b16 %v91
    %v392 = vunpack.c.l.b16 %v92
    %v393 = vunpack.c.h.b16 %v92
    %v394 = vunpack.c.l.b16 %v93
    %v395 = vunpack.c.h.b16 %v93
    %v396 = vunpack.c.l.b16 %v94
    %v397 = vunpack.c.h.b16 %v94
    %v398 = vunpack.c.l.b16 %v95
    %v399 = vunpack.c.h.b16 %v95
    %v400 = vunpack.c.l.b16 %v96
    %v401 = vunpack.c.h.b16 %v96
    %v402 = vunpack.c.l.b16 %v97
    %v403 = vunpack.c.h.b16 %v97
    %v404 = vunpack.c.l.b16 %v98
    %v405 = vunpack.c.h.b16 %v98
    %v406 = vunpack.c.l.b16 %v99
    %v407 = vunpack.c.h.b16 %v99
    %v408 = vunpack.c.l.b16 %v100
    %v409 = vunpack.c.h.b16 %v100
    %v410 = vunpack.c.l.b16 %v101
    %v411 = vunpack.c.h.b16 %v101
    %v412 = vunpack.c.l.b16 %v102
    %v413 = vunpack.c.h.b16 %v102
    %v414 = vunpack.c.l.b16 %v103
    %v415 = vunpack.c.h.b16 %v103
    %v416 = vunpack.c.l.b16 %v104
    %v417 = vunpack.c.h.b16 %v104
    %v418 = vunpack.c.l.b16 %v105
    %v419 = vunpack.c.h.b16 %v105
    %v420 = vunpack.c.l.b16 %v106
    %v421 = vunpack.c.h.b16 %v106
    %v422 = vunpack.c.l.b16 %v107
    %v423 = vunpack.c.h.b16 %v107
    %v424 = vunpack.c.l.b16 %v108
    %v425 = vunpack.c.h.b16 %v108
    %v426 = vunpack.c.l.b16 %v109
    %v427 = vunpack.c.h.b16 %v109
    %v428 = vunpack.c.l.b16 %v110
    %v429 = vunpack.c.h.b16 %v110
    %v430 = vunpack.c.l.b16 %v111
    %v431 = vunpack.c.h.b16 %v111
    %v432 = vunpack.c.l.b16 %v112
    %v433 = vunpack.c.h.b16 %v112
    %v434 = vunpack.c.l.b16 %v113
    %v435 = vunpack.c.h.b16 %v113
    %v436 = vunpack.c.l.b16 %v114
    %v437 = vunpack.c.h.b16 %v114
    %v438 = vunpack.c.l.b16 %v115
    %v439 = vunpack.c.h.b16 %v115
    %v440 = vunpack.c.l.b16 %v116
    %v441 = vunpack.c.h.b16 %v116
    %v442 = vunpack.c.l.b16 %v117
    %v443 = vunpack.c.h.b16 %v117
    %v444 = vunpack.c.l.b16 %v118
    %v445 = vunpack.c.h.b16 %v118
    %v446 = vpack.c.b16 %v326, %v318
    %v447 = vpack.c.b16 %v327, %v319
    %v448 = vpack.c.b16 %v328, %v320
    %v449 = vpack.c.b16 %v329, %v321
    %v450 = vpack.c.b16 %v330, %v322
    %v451 = vpack.c.b16 %v331, %v323
    %v452 = vpack.c.b16 %v332, %v324
    %v453 = vpack.c.b16 %v333, %v325
    %v454 = vpack.c.b16 %v342, %v334
    %v455 = vpack.c.b16 %v343, %v335
    %v456 = vpack.c.b16 %v344, %v336
    %v457 = vpack.c.b16 %v345, %v337
    %v458 = vpack.c.b16 %v346, %v338
    %v459 = vpack.c.b16 %v347, %v339
    %v460 = vpack.c.b16 %v348, %v340
    %v461 = vpack.c.b16 %v349, %v341
    %v462 = vpack.c.b16 %v358, %v350
    %v463 = vpack.c.b16 %v359, %v351
    %v464 = vpack.c.b16 %v360, %v352
    %v465 = vpack.c.b16 %v361, %v353
    %v466 = vpack.c.b16 %v362, %v354
    %v467 = vpack.c.b16 %v363, %v355
    %v468 = vpack.c.b16 %v364, %v356
    %v469 = vpack.c.b16 %v365, %v357
    %v470 = vpack.c.b16 %v374, %v366
    %v471 = vpack.c.b16 %v375, %v367
    %v472 = vpack.c.b16 %v376, %v368
    %v473 = vpack.c.b16 %v377, %v369
    %v474 = vpack.c.b16 %v378, %v370
    %v475 = vpack.c.b16 %v379, %v371
    %v476 = vpack.c.b16 %v380, %v372
    %v477 = vpack.c.b16 %v381, %v373
    %v478 = vpack.c.b16 %v390, %v382
    %v479 = vpack.c.b16 %v391, %v383
    %v480 = vpack.c.b16 %v392, %v384
    %v481 = vpack.c.b16 %v393, %v385
    %v482 = vpack.c.b16 %v394, %v386
    %v483 = vpack.c.b16 %v395, %v387
    %v484 = vpack.c.b16 %v396, %v388
    %v485 = vpack.c.b16 %v397, %v389
    %v486 = vpack.c.b16 %v406, %v398
    %v487 = vpack.c.b16 %v407, %v399
    %v488 = vpack.c.b16 %v408, %v400
    %v489 = vpack.c.b16 %v409, %v401
    %v490 = vpack.c.b16 %v410, %v402
    %v491 = vpack.c.b16 %v411, %v403
    %v492 = vpack.c.b16 %v412, %v404
    %v493 = vpack.c.b16 %v413, %v405
    %v494 = vpack.c.b16 %v422, %v414
    %v495 = vpack.c.b16 %v423, %v415
    %v496 = vpack.c.b16 %v424, %v416
    %v497 = vpack.c.b16 %v425, %v417
    %v498 = vpack.c.b16 %v426, %v418
    %v499 = vpack.c.b16 %v427, %v419
    %v500 = vpack.c.b16 %v428, %v420
    %v501 = vpack.c.b16 %v429, %v421
    %v502 = vpack.c.b16 %v438, %v430
    %v503 = vpack.c.b16 %v439, %v431
    %v504 = vpack.c.b16 %v440, %v432
    %v505 = vpack.c.b16 %v441, %v433
    %v506 = vpack.c.b16 %v442, %v434
    %v507 = vpack.c.b16 %v443, %v435
    %v508 = vpack.c.b16 %v444, %v436
    %v509 = vpack.c.b16 %v445, %v437
    %v702 = vunpack.c.l.b16 %v119
    %v703 = vunpack.c.l.b16 %v120
    %v704 = vunpack.c.l.b16 %v121
    %v705 = vunpack.c.l.b16 %v122
    %v706 = vunpack.c.l.b16 %v123
    %v707 = vunpack.c.l.b16 %v124
    %v708 = vunpack.c.l.b16 %v125
    %v709 = vunpack.c.l.b16 %v126
    %v710 = vunpack.c.l.b16 %v127
    %v711 = vunpack.c.l.b16 %v128
    %v712 = vunpack.c.l.b16 %v129
    %v713 = vunpack.c.l.b16 %v130
    %v714 = vunpack.c.l.b16 %v131
    %v715 = vunpack.c.l.b16 %v132
    %v716 = vunpack.c.l.b16 %v133
    %v717 = vunpack.c.l.b16 %v134
    %v718 = vunpack.c.l.b16 %v135
    %v719 = vunpack.c.l.b16 %v136
    %v720 = vunpack.c.l.b16 %v137
    %v721 = vunpack.c.l.b16 %v138
    %v722 = vunpack.c.l.b16 %v139
    %v723 = vunpack.c.l.b16 %v140
    %v724 = vunpack.c.l.b16 %v141
    %v725 = vunpack.c.l.b16 %v142
    %v726 = vunpack.c.l.b16 %v143
    %v727 = vunpack.c.l.b16 %v144
    %v728 = vunpack.c.l.b16 %v145
    %v729 = vunpack.c.l.b16 %v146
    %v730 = vunpack.c.l.b16 %v147
    %v731 = vunpack.c.l.b16 %v148
    %v732 = vunpack.c.l.b16 %v149
    %v733 = vunpack.c.l.b16 %v150
    %v734 = vunpack.c.l.b16 %v151
    %v735 = vunpack.c.l.b16 %v152
    %v736 = vunpack.c.l.b16 %v153
    %v737 = vunpack.c.l.b16 %v154
    %v738 = vunpack.c.l.b16 %v155
    %v739 = vunpack.c.l.b16 %v156
    %v740 = vunpack.c.l.b16 %v157
    %v741 = vunpack.c.l.b16 %v158
    %v742 = vunpack.c.l.b16 %v159
    %v743 = vunpack.c.l.b16 %v160
    %v744 = vunpack.c.l.b16 %v161
    %v745 = vunpack.c.l.b16 %v162
    %v746 = vunpack.c.l.b16 %v163
    %v747 = vunpack.c.l.b16 %v164
    %v748 = vunpack.c.l.b16 %v165
    %v749 = vunpack.c.l.b16 %v166
    %v750 = vunpack.c.l.b16 %v167
    %v751 = vunpack.c.l.b16 %v168
    %v752 = vunpack.c.l.b16 %v169
    %v753 = vunpack.c.l.b16 %v170
    %v754 = vunpack.c.l.b16 %v171
    %v755 = vunpack.c.l.b16 %v172
    %v756 = vunpack.c.l.b16 %v173
    %v757 = vunpack.c.l.b16 %v174
    %v758 = vunpack.c.l.b16 %v175
    %v759 = vunpack.c.l.b16 %v176
    %v760 = vunpack.c.l.b16 %v177
    %v761 = vunpack.c.l.b16 %v178
    %v762 = vunpack.c.l.b16 %v179
    %v763 = vunpack.c.l.b16 %v180
    %v764 = vunpack.c.l.b16 %v181
    %v765 = vunpack.c.l.b16 %v182
    %v766 = vunpack.c.l.b16 %v183
    %v767 = vunpack.c.l.b16 %v184
    %v768 = vunpack.c.l.b16 %v185
    %v769 = vunpack.c.l.b16 %v186
    %v770 = vunpack.c.l.b16 %v187
    %v771 = vunpack.c.l.b16 %v188
    %v772 = vunpack.c.l.b16 %v189
    %v773 = vunpack.c.l.b16 %v190
    %v774 = vunpack.c.l.b16 %v191
    %v775 = vunpack.c.l.b16 %v192
    %v776 = vunpack.c.l.b16 %v193
    %v777 = vunpack.c.l.b16 %v194
    %v778 = vunpack.c.l.b16 %v195
    %v779 = vunpack.c.l.b16 %v196
    %v780 = vunpack.c.l.b16 %v197
    %v781 = vunpack.c.l.b16 %v198
    %v782 = vunpack.c.l.b16 %v199
    %v783 = vunpack.c.l.b16 %v200
    %v784 = vunpack.c.l.b16 %v201
    %v785 = vunpack.c.l.b16 %v202
    %v786 = vunpack.c.l.b16 %v203
    %v787 = vunpack.c.l.b16 %v204
    %v788 = vunpack.c.l.b16 %v205
    %v789 = vunpack.c.l.b16 %v206
    %v790 = vunpack.c.l.b16 %v207
    %v791 = vunpack.c.l.b16 %v208
    %v792 = vunpack.c.l.b16 %v209
    %v793 = vunpack.c.l.b16 %v210
    %v794 = vunpack.c.l.b16 %v211
    %v795 = vunpack.c.l.b16 %v212
    %v796 = vunpack.c.l.b16 %v213
    %v797 = vunpack.c.l.b16 %v214
    %v798 = vunpack.c.l.b16 %v215
    %v799 = vunpack.c.l.b16 %v216
    %v800 = vunpack.c.l.b16 %v217
    %v801 = vunpack.c.l.b16 %v218
    %v802 = vunpack.c.l.b16 %v219
    %v803 = vunpack.c.l.b16 %v220
    %v804 = vunpack.c.l.b16 %v221
    %v805 = vunpack.c.l.b16 %v222
    %v806 = vunpack.c.l.b16 %v223
    %v807 = vunpack.c.l.b16 %v224
    %v808 = vunpack.c.l.b16 %v225
    %v809 = vunpack.c.l.b16 %v226
    %v810 = vunpack.c.l.b16 %v227
    %v811 = vunpack.c.l.b16 %v228
    %v812 = vunpack.c.l.b16 %v229
    %v813 = vunpack.c.l.b16 %v230
    %v814 = vunpack.c.l.b16 %v231
    %v815 = vunpack.c.l.b16 %v232
    %v816 = vunpack.c.l.b16 %v233
    %v817 = vunpack.c.l.b16 %v234
    %v818 = vunpack.c.l.b16 %v235
    %v819 = vunpack.c.l.b16 %v236
    %v820 = vunpack.c.l.b16 %v237
    %v821 = vunpack.c.l.b16 %v238
    %v822 = vunpack.c.l.b16 %v239
    %v823 = vunpack.c.l.b16 %v240
    %v824 = vunpack.c.l.b16 %v241
    %v825 = vunpack.c.l.b16 %v242
    %v826 = vunpack.c.l.b16 %v243
    %v827 = vunpack.c.l.b16 %v244
    %v828 = vunpack.c.l.b16 %v245
    %v829 = vunpack.c.l.b16 %v246
    %v830 = vpack.c.b16 %v703, %v702
    %v831 = vpack.c.b16 %v705, %v704
    %v832 = vpack.c.b16 %v707, %v706
    %v833 = vpack.c.b16 %v709, %v708
    %v834 = vpack.c.b16 %v711, %v710
    %v835 = vpack.c.b16 %v713, %v712
    %v836 = vpack.c.b16 %v715, %v714
    %v837 = vpack.c.b16 %v717, %v716
    %v838 = vpack.c.b16 %v719, %v718
    %v839 = vpack.c.b16 %v721, %v720
    %v840 = vpack.c.b16 %v723, %v722
    %v841 = vpack.c.b16 %v725, %v724
    %v842 = vpack.c.b16 %v727, %v726
    %v843 = vpack.c.b16 %v729, %v728
    %v844 = vpack.c.b16 %v731, %v730
    %v845 = vpack.c.b16 %v733, %v732
    %v846 = vpack.c.b16 %v735, %v734
    %v847 = vpack.c.b16 %v737, %v736
    %v848 = vpack.c.b16 %v739, %v738
    %v849 = vpack.c.b16 %v741, %v740
    %v850 = vpack.c.b16 %v743, %v742
    %v851 = vpack.c.b16 %v745, %v744
    %v852 = vpack.c.b16 %v747, %v746
    %v853 = vpack.c.b16 %v749, %v748
    %v854 = vpack.c.b16 %v751, %v750
    %v855 = vpack.c.b16 %v753, %v752
    %v856 = vpack.c.b16 %v755, %v754
    %v857 = vpack.c.b16 %v757, %v756
    %v858 = vpack.c.b16 %v759, %v758
    %v859 = vpack.c.b16 %v761, %v760
    %v860 = vpack.c.b16 %v763, %v762
    %v861 = vpack.c.b16 %v765, %v764
    %v862 = vpack.c.b16 %v767, %v766
    %v863 = vpack.c.b16 %v769, %v768
    %v864 = vpack.c.b16 %v771, %v770
    %v865 = vpack.c.b16 %v773, %v772
    %v866 = vpack.c.b16 %v775, %v774
    %v867 = vpack.c.b16 %v777, %v776
    %v868 = vpack.c.b16 %v779, %v778
    %v869 = vpack.c.b16 %v781, %v780
    %v870 = vpack.c.b16 %v783, %v782
    %v871 = vpack.c.b16 %v785, %v784
    %v872 = vpack.c.b16 %v787, %v786
    %v873 = vpack.c.b16 %v789, %v788
    %v874 = vpack.c.b16 %v791, %v790
    %v875 = vpack.c.b16 %v793, %v792
    %v876 = vpack.c.b16 %v795, %v794
    %v877 = vpack.c.b16 %v797, %v796
    %v878 = vpack.c.b16 %v799, %v798
    %v879 = vpack.c.b16 %v801, %v800
    %v880 = vpack.c.b16 %v803, %v802
    %v881 = vpack.c.b16 %v805, %v804
    %v882 = vpack.c.b16 %v807, %v806
    %v883 = vpack.c.b16 %v809, %v808
    %v884 = vpack.c.b16 %v811, %v810
    %v885 = vpack.c.b16 %v813, %v812
    %v886 = vpack.c.b16 %v815, %v814
    %v887 = vpack.c.b16 %v817, %v816
    %v888 = vpack.c.b16 %v819, %v818
    %v889 = vpack.c.b16 %v821, %v820
    %v890 = vpack.c.b16 %v823, %v822
    %v891 = vpack.c.b16 %v825, %v824
    %v892 = vpack.c.b16 %v827, %v826
    %v893 = vpack.c.b16 %v829, %v828
    %958 = vmatprep.subr.bf16.mxu0 0
    %959 = vmatpush1.bf16.msra.mxu0 %v830
    %960 = vmatprep.subr.bf16.mxu0 0
    %961 = vmatpush1.bf16.msra.mxu0 %v831
    %962 = vmatprep.subr.bf16.mxu0 0
    %963 = vmatpush1.bf16.msra.mxu0 %v832
    %964 = vmatprep.subr.bf16.mxu0 0
    %965 = vmatpush1.bf16.msra.mxu0 %v833
    %966 = vmatprep.subr.bf16.mxu0 0
    %967 = vmatpush1.bf16.msra.mxu0 %v834
    %968 = vmatprep.subr.bf16.mxu0 0
    %969 = vmatpush1.bf16.msra.mxu0 %v835
    %970 = vmatprep.subr.bf16.mxu0 0
    %971 = vmatpush1.bf16.msra.mxu0 %v836
    %972 = vmatprep.subr.bf16.mxu0 0
    %973 = vmatpush1.bf16.msra.mxu0 %v837
    %974 = vmatprep.subr.bf16.mxu0 0
    %975 = vmatpush1.bf16.msra.mxu0 %v838
    %976 = vmatprep.subr.bf16.mxu0 0
    %977 = vmatpush1.bf16.msra.mxu0 %v839
    %978 = vmatprep.subr.bf16.mxu0 0
    %979 = vmatpush1.bf16.msra.mxu0 %v840
    %980 = vmatprep.subr.bf16.mxu0 0
    %981 = vmatpush1.bf16.msra.mxu0 %v841
    %982 = vmatprep.subr.bf16.mxu0 0
    %983 = vmatpush1.bf16.msra.mxu0 %v842
    %984 = vmatprep.subr.bf16.mxu0 0
    %985 = vmatpush1.bf16.msra.mxu0 %v843
    %986 = vmatprep.subr.bf16.mxu0 0
    %987 = vmatpush1.bf16.msra.mxu0 %v844
    %988 = vmatprep.subr.bf16.mxu0 0
    %989 = vmatpush1.bf16.msra.mxu0 %v845
    %990 = vmatprep.mubr.bf16.mxu0 %v447
    %991 = vmatmul.mubr.bf16.gmra.mrb[0].mxu0 %v446
    %v992 = vpop.f32.mrb[0].mxu0
    %v993 = vadd.f32 %v252, %v992
    %v994 = vpop.f32.mrb[0].mxu0
    %v995 = vpop.f32.mrb[0].mxu0
    %v996 = vadd.f32 %v252, %v995
    %v997 = vpop.f32.mrb[0].mxu0
    %998 = vmatprep.mubr.bf16.mxu0 %v455
    %999 = vmatmul.mubr.bf16.gmra.mrb[0].mxu0 %v454
    %v1000 = vpop.f32.mrb[0].mxu0
    %v1001 = vadd.f32 %v252, %v1000
    %v1002 = vpop.f32.mrb[0].mxu0
    %v1003 = vpop.f32.mrb[0].mxu0
    %v1004 = vadd.f32 %v252, %v1003
    %v1005 = vpop.f32.mrb[0].mxu0
    %1006 = vmatprep.mubr.bf16.mxu0 %v463
    %1007 = vmatmul.mubr.bf16.gmra.mrb[0].mxu0 %v462
    %v1008 = vpop.f32.mrb[0].mxu0
    %v1009 = vadd.f32 %v252, %v1008
    %v1010 = vpop.f32.mrb[0].mxu0
    %v1011 = vpop.f32.mrb[0].mxu0
    %v1012 = vadd.f32 %v252, %v1011
    %v1013 = vpop.f32.mrb[0].mxu0
    %1014 = vmatprep.mubr.bf16.mxu0 %v471
    %1015 = vmatmul.mubr.bf16.gmra.mrb[0].mxu0 %v470
    %v1016 = vpop.f32.mrb[0].mxu0
    %v1017 = vadd.f32 %v252, %v1016
    %v1018 = vpop.f32.mrb[0].mxu0
    %v1019 = vpop.f32.mrb[0].mxu0
    %v1020 = vadd.f32 %v252, %v1019
    %v1021 = vpop.f32.mrb[0].mxu0
    %1022 = vmatprep.mubr.bf16.mxu0 %v479
    %1023 = vmatmul.mubr.bf16.gmra.mrb[0].mxu0 %v478
    %v1024 = vpop.f32.mrb[0].mxu0
    %v1025 = vadd.f32 %v252, %v1024
    %v1026 = vpop.f32.mrb[0].mxu0
    %v1027 = vpop.f32.mrb[0].mxu0
    %v1028 = vadd.f32 %v252, %v1027
    %v1029 = vpop.f32.mrb[0].mxu0
    %1030 = vmatprep.mubr.bf16.mxu0 %v487
    %1031 = vmatmul.mubr.bf16.gmra.mrb[0].mxu0 %v486
    %v1032 = vpop.f32.mrb[0].mxu0
    %v1033 = vadd.f32 %v252, %v1032
    %v1034 = vpop.f32.mrb[0].mxu0
    %v1035 = vpop.f32.mrb[0].mxu0
    %v1036 = vadd.f32 %v252, %v1035
    %v1037 = vpop.f32.mrb[0].mxu0
    %1038 = vmatprep.mubr.bf16.mxu0 %v495
    %1039 = vmatmul.mubr.bf16.gmra.mrb[0].mxu0 %v494
    %v1040 = vpop.f32.mrb[0].mxu0
    %v1041 = vadd.f32 %v252, %v1040
    %v1042 = vpop.f32.mrb[0].mxu0
    %v1043 = vpop.f32.mrb[0].mxu0
    %v1044 = vadd.f32 %v252, %v1043
    %v1045 = vpop.f32.mrb[0].mxu0
    %1046 = vmatprep.mubr.bf16.mxu0 %v503
    %1047 = vmatmul.mubr.bf16.gmra.mrb[0].mxu0 %v502
    %v1048 = vpop.f32.mrb[0].mxu0
    %v1049 = vadd.f32 %v252, %v1048
    %v1050 = vpop.f32.mrb[0].mxu0
    %v1051 = vpop.f32.mrb[0].mxu0
    %v1052 = vadd.f32 %v252, %v1051
    %v1053 = vpop.f32.mrb[0].mxu0
    %1054 = vdwg.mxu0
    %1055 = vmatprep.subr.bf16.mxu0 0
    %1056 = vmatpush1.bf16.msra.mxu0 %v846
    %1057 = vmatprep.subr.bf16.mxu0 0
    %1058 = vmatpush1.bf16.msra.mxu0 %v847
    %1059 = vmatprep.subr.bf16.mxu0 0
    %1060 = vmatpush1.bf16.msra.mxu0 %v848
    %1061 = vmatprep.subr.bf16.mxu0 0
    %1062 = vmatpush1.bf16.msra.mxu0 %v849
    %1063 = vmatprep.subr.bf16.mxu0 0
    %1064 = vmatpush1.bf16.msra.mxu0 %v850
    %1065 = vmatprep.subr.bf16.mxu0 0
    %1066 = vmatpush1.bf16.msra.mxu0 %v851
    %1067 = vmatprep.subr.bf16.mxu0 0
    %1068 = vmatpush1.bf16.msra.mxu0 %v852
    %1069 = vmatprep.subr.bf16.mxu0 0
    %1070 = vmatpush1.bf16.msra.mxu0 %v853
    %1071 = vmatprep.subr.bf16.mxu0 0
    %1072 = vmatpush1.bf16.msra.mxu0 %v854
    %1073 = vmatprep.subr.bf16.mxu0 0
    %1074 = vmatpush1.bf16.msra.mxu0 %v855
    %1075 = vmatprep.subr.bf16.mxu0 0
    %1076 = vmatpush1.bf16.msra.mxu0 %v856
    %1077 = vmatprep.subr.bf16.mxu0 0
    %1078 = vmatpush1.bf16.msra.mxu0 %v857
    %1079 = vmatprep.subr.bf16.mxu0 0
    %1080 = vmatpush1.bf16.msra.mxu0 %v858
    %1081 = vmatprep.subr.bf16.mxu0 0
    %1082 = vmatpush1.bf16.msra.mxu0 %v859
    %1083 = vmatprep.subr.bf16.mxu0 0
    %1084 = vmatpush1.bf16.msra.mxu0 %v860
    %1085 = vmatprep.subr.bf16.mxu0 0
    %1086 = vmatpush1.bf16.msra.mxu0 %v861
    %1087 = vmatprep.mubr.bf16.mxu0 %v449
    %1088 = vmatmul.mubr.bf16.gmra.mrb[0].mxu0 %v448
    %v1089 = vpop.f32.mrb[0].mxu0
    %v1090 = vadd.f32 %v993, %v1089
    %v1091 = vpop.f32.mrb[0].mxu0
    %v1092 = vpop.f32.mrb[0].mxu0
    %v1093 = vadd.f32 %v996, %v1092
    %v1094 = vpop.f32.mrb[0].mxu0
    %1095 = vmatprep.mubr.bf16.mxu0 %v457
    %1096 = vmatmul.mubr.bf16.gmra.mrb[0].mxu0 %v456
    %v1097 = vpop.f32.mrb[0].mxu0
    %v1098 = vadd.f32 %v1001, %v1097
    %v1099 = vpop.f32.mrb[0].mxu0
    %v1100 = vpop.f32.mrb[0].mxu0
    %v1101 = vadd.f32 %v1004, %v1100
    %v1102 = vpop.f32.mrb[0].mxu0
    %1103 = vmatprep.mubr.bf16.mxu0 %v465
    %1104 = vmatmul.mubr.bf16.gmra.mrb[0].mxu0 %v464
    %v1105 = vpop.f32.mrb[0].mxu0
    %v1106 = vadd.f32 %v1009, %v1105
    %v1107 = vpop.f32.mrb[0].mxu0
    %v1108 = vpop.f32.mrb[0].mxu0
    %v1109 = vadd.f32 %v1012, %v1108
    %v1110 = vpop.f32.mrb[0].mxu0
    %1111 = vmatprep.mubr.bf16.mxu0 %v473
    %1112 = vmatmul.mubr.bf16.gmra.mrb[0].mxu0 %v472
    %v1113 = vpop.f32.mrb[0].mxu0
    %v1114 = vadd.f32 %v1017, %v1113
    %v1115 = vpop.f32.mrb[0].mxu0
    %v1116 = vpop.f32.mrb[0].mxu0
    %v1117 = vadd.f32 %v1020, %v1116
    %v1118 = vpop.f32.mrb[0].mxu0
    %1119 = vmatprep.mubr.bf16.mxu0 %v481
    %1120 = vmatmul.mubr.bf16.gmra.mrb[0].mxu0 %v480
    %v1121 = vpop.f32.mrb[0].mxu0
    %v1122 = vadd.f32 %v1025, %v1121
    %v1123 = vpop.f32.mrb[0].mxu0
    %v1124 = vpop.f32.mrb[0].mxu0
    %v1125 = vadd.f32 %v1028, %v1124
    %v1126 = vpop.f32.mrb[0].mxu0
    %1127 = vmatprep.mubr.bf16.mxu0 %v489
    %1128 = vmatmul.mubr.bf16.gmra.mrb[0].mxu0 %v488
    %v1129 = vpop.f32.mrb[0].mxu0
    %v1130 = vadd.f32 %v1033, %v1129
    %v1131 = vpop.f32.mrb[0].mxu0
    %v1132 = vpop.f32.mrb[0].mxu0
    %v1133 = vadd.f32 %v1036, %v1132
    %v1134 = vpop.f32.mrb[0].mxu0
    %1135 = vmatprep.mubr.bf16.mxu0 %v497
    %1136 = vmatmul.mubr.bf16.gmra.mrb[0].mxu0 %v496
    %v1137 = vpop.f32.mrb[0].mxu0
    %v1138 = vadd.f32 %v1041, %v1137
    %v1139 = vpop.f32.mrb[0].mxu0
    %v1140 = vpop.f32.mrb[0].mxu0
    %v1141 = vadd.f32 %v1044, %v1140
    %v1142 = vpop.f32.mrb[0].mxu0
    %1143 = vmatprep.mubr.bf16.mxu0 %v505
    %1144 = vmatmul.mubr.bf16.gmra.mrb[0].mxu0 %v504
    %v1145 = vpop.f32.mrb[0].mxu0
    %v1146 = vadd.f32 %v1049, %v1145
    %v1147 = vpop.f32.mrb[0].mxu0
    %v1148 = vpop.f32.mrb[0].mxu0
    %v1149 = vadd.f32 %v1052, %v1148
    %v1150 = vpop.f32.mrb[0].mxu0
    %1151 = vdwg.mxu0
    %1152 = vmatprep.subr.bf16.mxu0 0
    %1153 = vmatpush1.bf16.msra.mxu0 %v862
    %1154 = vmatprep.subr.bf16.mxu0 0
    %1155 = vmatpush1.bf16.msra.mxu0 %v863
    %1156 = vmatprep.subr.bf16.mxu0 0
    %1157 = vmatpush1.bf16.msra.mxu0 %v864
    %1158 = vmatprep.subr.bf16.mxu0 0
    %1159 = vmatpush1.bf16.msra.mxu0 %v865
    %1160 = vmatprep.subr.bf16.mxu0 0
    %1161 = vmatpush1.bf16.msra.mxu0 %v866
    %1162 = vmatprep.subr.bf16.mxu0 0
    %1163 = vmatpush1.bf16.msra.mxu0 %v867
    %1164 = vmatprep.subr.bf16.mxu0 0
    %1165 = vmatpush1.bf16.msra.mxu0 %v868
    %1166 = vmatprep.subr.bf16.mxu0 0
    %1167 = vmatpush1.bf16.msra.mxu0 %v869
    %1168 = vmatprep.subr.bf16.mxu0 0
    %1169 = vmatpush1.bf16.msra.mxu0 %v870
    %1170 = vmatprep.subr.bf16.mxu0 0
    %1171 = vmatpush1.bf16.msra.mxu0 %v871
    %1172 = vmatprep.subr.bf16.mxu0 0
    %1173 = vmatpush1.bf16.msra.mxu0 %v872
    %1174 = vmatprep.subr.bf16.mxu0 0
    %1175 = vmatpush1.bf16.msra.mxu0 %v873
    %1176 = vmatprep.subr.bf16.mxu0 0
    %1177 = vmatpush1.bf16.msra.mxu0 %v874
    %1178 = vmatprep.subr.bf16.mxu0 0
    %1179 = vmatpush1.bf16.msra.mxu0 %v875
    %1180 = vmatprep.subr.bf16.mxu0 0
    %1181 = vmatpush1.bf16.msra.mxu0 %v876
    %1182 = vmatprep.subr.bf16.mxu0 0
    %1183 = vmatpush1.bf16.msra.mxu0 %v877
    %1184 = vmatprep.mubr.bf16.mxu0 %v451
    %1185 = vmatmul.mubr.bf16.gmra.mrb[0].mxu0 %v450
    %v1186 = vpop.f32.mrb[0].mxu0
    %v1187 = vadd.f32 %v1090, %v1186
    %v1188 = vpop.f32.mrb[0].mxu0
    %v1189 = vpop.f32.mrb[0].mxu0
    %v1190 = vadd.f32 %v1093, %v1189
    %v1191 = vpop.f32.mrb[0].mxu0
    %1192 = vmatprep.mubr.bf16.mxu0 %v459
    %1193 = vmatmul.mubr.bf16.gmra.mrb[0].mxu0 %v458
    %v1194 = vpop.f32.mrb[0].mxu0
    %v1195 = vadd.f32 %v1098, %v1194
    %v1196 = vpop.f32.mrb[0].mxu0
    %v1197 = vpop.f32.mrb[0].mxu0
    %v1198 = vadd.f32 %v1101, %v1197
    %v1199 = vpop.f32.mrb[0].mxu0
    %1200 = vmatprep.mubr.bf16.mxu0 %v467
    %1201 = vmatmul.mubr.bf16.gmra.mrb[0].mxu0 %v466
    %v1202 = vpop.f32.mrb[0].mxu0
    %v1203 = vadd.f32 %v1106, %v1202
    %v1204 = vpop.f32.mrb[0].mxu0
    %v1205 = vpop.f32.mrb[0].mxu0
    %v1206 = vadd.f32 %v1109, %v1205
    %v1207 = vpop.f32.mrb[0].mxu0
    %1208 = vmatprep.mubr.bf16.mxu0 %v475
    %1209 = vmatmul.mubr.bf16.gmra.mrb[0].mxu0 %v474
    %v1210 = vpop.f32.mrb[0].mxu0
    %v1211 = vadd.f32 %v1114, %v1210
    %v1212 = vpop.f32.mrb[0].mxu0
    %v1213 = vpop.f32.mrb[0].mxu0
    %v1214 = vadd.f32 %v1117, %v1213
    %v1215 = vpop.f32.mrb[0].mxu0
    %1216 = vmatprep.mubr.bf16.mxu0 %v483
    %1217 = vmatmul.mubr.bf16.gmra.mrb[0].mxu0 %v482
    %v1218 = vpop.f32.mrb[0].mxu0
    %v1219 = vadd.f32 %v1122, %v1218
    %v1220 = vpop.f32.mrb[0].mxu0
    %v1221 = vpop.f32.mrb[0].mxu0
    %v1222 = vadd.f32 %v1125, %v1221
    %v1223 = vpop.f32.mrb[0].mxu0
    %1224 = vmatprep.mubr.bf16.mxu0 %v491
    %1225 = vmatmul.mubr.bf16.gmra.mrb[0].mxu0 %v490
    %v1226 = vpop.f32.mrb[0].mxu0
    %v1227 = vadd.f32 %v1130, %v1226
    %v1228 = vpop.f32.mrb[0].mxu0
    %v1229 = vpop.f32.mrb[0].mxu0
    %v1230 = vadd.f32 %v1133, %v1229
    %v1231 = vpop.f32.mrb[0].mxu0
    %1232 = vmatprep.mubr.bf16.mxu0 %v499
    %1233 = vmatmul.mubr.bf16.gmra.mrb[0].mxu0 %v498
    %v1234 = vpop.f32.mrb[0].mxu0
    %v1235 = vadd.f32 %v1138, %v1234
    %v1236 = vpop.f32.mrb[0].mxu0
    %v1237 = vpop.f32.mrb[0].mxu0
    %v1238 = vadd.f32 %v1141, %v1237
    %v1239 = vpop.f32.mrb[0].mxu0
    %1240 = vmatprep.mubr.bf16.mxu0 %v507
    %1241 = vmatmul.mubr.bf16.gmra.mrb[0].mxu0 %v506
    %v1242 = vpop.f32.mrb[0].mxu0
    %v1243 = vadd.f32 %v1146, %v1242
    %v1244 = vpop.f32.mrb[0].mxu0
    %v1245 = vpop.f32.mrb[0].mxu0
    %v1246 = vadd.f32 %v1149, %v1245
    %v1247 = vpop.f32.mrb[0].mxu0
    %1248 = vdwg.mxu0
    %1249 = vmatprep.subr.bf16.mxu0 0
    %1250 = vmatpush1.bf16.msra.mxu0 %v878
    %1251 = vmatprep.subr.bf16.mxu0 0
    %1252 = vmatpush1.bf16.msra.mxu0 %v879
    %1253 = vmatprep.subr.bf16.mxu0 0
    %1254 = vmatpush1.bf16.msra.mxu0 %v880
    %1255 = vmatprep.subr.bf16.mxu0 0
    %1256 = vmatpush1.bf16.msra.mxu0 %v881
    %1257 = vmatprep.subr.bf16.mxu0 0
    %1258 = vmatpush1.bf16.msra.mxu0 %v882
    %1259 = vmatprep.subr.bf16.mxu0 0
    %1260 = vmatpush1.bf16.msra.mxu0 %v883
    %1261 = vmatprep.subr.bf16.mxu0 0
    %1262 = vmatpush1.bf16.msra.mxu0 %v884
    %1263 = vmatprep.subr.bf16.mxu0 0
    %1264 = vmatpush1.bf16.msra.mxu0 %v885
    %1265 = vmatprep.subr.bf16.mxu0 0
    %1266 = vmatpush1.bf16.msra.mxu0 %v886
    %1267 = vmatprep.subr.bf16.mxu0 0
    %1268 = vmatpush1.bf16.msra.mxu0 %v887
    %1269 = vmatprep.subr.bf16.mxu0 0
    %1270 = vmatpush1.bf16.msra.mxu0 %v888
    %1271 = vmatprep.subr.bf16.mxu0 0
    %1272 = vmatpush1.bf16.msra.mxu0 %v889
    %1273 = vmatprep.subr.bf16.mxu0 0
    %1274 = vmatpush1.bf16.msra.mxu0 %v890
    %1275 = vmatprep.subr.bf16.mxu0 0
    %1276 = vmatpush1.bf16.msra.mxu0 %v891
    %1277 = vmatprep.subr.bf16.mxu0 0
    %1278 = vmatpush1.bf16.msra.mxu0 %v892
    %1279 = vmatprep.subr.bf16.mxu0 0
    %1280 = vmatpush1.bf16.msra.mxu0 %v893
    %1281 = vmatprep.mubr.bf16.mxu0 %v453
    %1282 = vmatmul.mubr.bf16.gmra.mrb[0].mxu0 %v452
    %v1283 = vpop.f32.mrb[0].mxu0
    %v1284 = vadd.f32 %v1187, %v1283
    %v1285 = vpop.f32.mrb[0].mxu0
    %v1286 = vpop.f32.mrb[0].mxu0
    %v1287 = vadd.f32 %v1190, %v1286
    %v1288 = vpop.f32.mrb[0].mxu0
    %1289 = vmatprep.mubr.bf16.mxu0 %v461
    %1290 = vmatmul.mubr.bf16.gmra.mrb[0].mxu0 %v460
    %v1291 = vpop.f32.mrb[0].mxu0
    %v1292 = vadd.f32 %v1195, %v1291
    %v1293 = vpop.f32.mrb[0].mxu0
    %v1294 = vpop.f32.mrb[0].mxu0
    %v1295 = vadd.f32 %v1198, %v1294
    %v1296 = vpop.f32.mrb[0].mxu0
    %1297 = vmatprep.mubr.bf16.mxu0 %v469
    %1298 = vmatmul.mubr.bf16.gmra.mrb[0].mxu0 %v468
    %v1299 = vpop.f32.mrb[0].mxu0
    %v1300 = vadd.f32 %v1203, %v1299
    %v1301 = vpop.f32.mrb[0].mxu0
    %v1302 = vpop.f32.mrb[0].mxu0
    %v1303 = vadd.f32 %v1206, %v1302
    %v1304 = vpop.f32.mrb[0].mxu0
    %1305 = vmatprep.mubr.bf16.mxu0 %v477
    %1306 = vmatmul.mubr.bf16.gmra.mrb[0].mxu0 %v476
    %v1307 = vpop.f32.mrb[0].mxu0
    %v1308 = vadd.f32 %v1211, %v1307
    %v1309 = vpop.f32.mrb[0].mxu0
    %v1310 = vpop.f32.mrb[0].mxu0
    %v1311 = vadd.f32 %v1214, %v1310
    %v1312 = vpop.f32.mrb[0].mxu0
    %1313 = vmatprep.mubr.bf16.mxu0 %v485
    %1314 = vmatmul.mubr.bf16.gmra.mrb[0].mxu0 %v484
    %v1315 = vpop.f32.mrb[0].mxu0
    %v1316 = vadd.f32 %v1219, %v1315
    %v1317 = vpop.f32.mrb[0].mxu0
    %v1318 = vpop.f32.mrb[0].mxu0
    %v1319 = vadd.f32 %v1222, %v1318
    %v1320 = vpop.f32.mrb[0].mxu0
    %1321 = vmatprep.mubr.bf16.mxu0 %v493
    %1322 = vmatmul.mubr.bf16.gmra.mrb[0].mxu0 %v492
    %v1323 = vpop.f32.mrb[0].mxu0
    %v1324 = vadd.f32 %v1227, %v1323
    %v1325 = vpop.f32.mrb[0].mxu0
    %v1326 = vpop.f32.mrb[0].mxu0
    %v1327 = vadd.f32 %v1230, %v1326
    %v1328 = vpop.f32.mrb[0].mxu0
    %1329 = vmatprep.mubr.bf16.mxu0 %v501
    %1330 = vmatmul.mubr.bf16.gmra.mrb[0].mxu0 %v500
    %v1331 = vpop.f32.mrb[0].mxu0
    %v1332 = vadd.f32 %v1235, %v1331
    %v1333 = vpop.f32.mrb[0].mxu0
    %v1334 = vpop.f32.mrb[0].mxu0
    %v1335 = vadd.f32 %v1238, %v1334
    %v1336 = vpop.f32.mrb[0].mxu0
    %1337 = vmatprep.mubr.bf16.mxu0 %v509
    %1338 = vmatmul.mubr.bf16.gmra.mrb[0].mxu0 %v508
    %v1339 = vpop.f32.mrb[0].mxu0
    %v1340 = vadd.f32 %v1243, %v1339
    %v1341 = vpop.f32.mrb[0].mxu0
    %v1342 = vpop.f32.mrb[0].mxu0
    %v1343 = vadd.f32 %v1246, %v1342
    %v1344 = vpop.f32.mrb[0].mxu0
    %1345 = vdwg.mxu0
    %v1346 = vmax.f32 %v1284, 0.0
    %v1347 = vmax.f32 %v1287, 0.0
    %v1348 = vmax.f32 %v1292, 0.0
    %v1349 = vmax.f32 %v1295, 0.0
    %v1350 = vmax.f32 %v1300, 0.0
    %v1351 = vmax.f32 %v1303, 0.0
    %v1352 = vmax.f32 %v1308, 0.0
    %v1353 = vmax.f32 %v1311, 0.0
    %v1354 = vmax.f32 %v1316, 0.0
    %v1355 = vmax.f32 %v1319, 0.0
    %v1356 = vmax.f32 %v1324, 0.0
    %v1357 = vmax.f32 %v1327, 0.0
    %v1358 = vmax.f32 %v1332, 0.0
    %v1359 = vmax.f32 %v1335, 0.0
    %v1360 = vmax.f32 %v1340, 0.0
    %v1361 = vmax.f32 %v1343, 0.0
    %v1362 = vld [vmem:[%s3] sm:$0xff]
    %v1363 = vld [vmem:[%s3 + $0x8] sm:$0xff]
    %v1364 = vld [vmem:[%s3 + $0x10] sm:$0xff]
    %v1365 = vld [vmem:[%s3 + $0x18] sm:$0xff]
    %v1366 = vld [vmem:[%s3 + $0x20] sm:$0xff]
    %v1367 = vld [vmem:[%s3 + $0x28] sm:$0xff]
    %v1368 = vld [vmem:[%s3 + $0x30] sm:$0xff]
    %v1369 = vld [vmem:[%s3 + $0x38] sm:$0xff]
    %v1370 = vld [vmem:[%s3 + $0x40] sm:$0xff]
    %v1371 = vld [vmem:[%s3 + $0x48] sm:$0xff]
    %v1372 = vld [vmem:[%s3 + $0x50] sm:$0xff]
    %v1373 = vld [vmem:[%s3 + $0x58] sm:$0xff]
    %v1374 = vld [vmem:[%s3 + $0x60] sm:$0xff]
    %v1375 = vld [vmem:[%s3 + $0x68] sm:$0xff]
    %v1376 = vld [vmem:[%s3 + $0x70] sm:$0xff]
    %v1377 = vld [vmem:[%s3 + $0x78] sm:$0xff]
    %v1378 = vld [vmem:[%s4] sm:$0x1]
    %v1380 = vlaneseq
    %v1381 = vshrl.u32 %v1380, 7
    %v1382 = vsub.s32 0, %v1381
    %v1383 = vrot.slane %v1378, %v1382
    %1385 = vmatprep.subr.mxu0 0.0
    %1386 = vmatpush1.msra.mxu0 %v1362
    %1387 = vmatprep.subr.mxu0 0.0
    %1388 = vmatpush1.msra.mxu0 %v1363
    %1389 = vmatprep.subr.mxu0 0.0
    %1390 = vmatpush1.msra.mxu0 %v1364
    %1391 = vmatprep.subr.mxu0 0.0
    %1392 = vmatpush1.msra.mxu0 %v1365
    %1393 = vmatprep.subr.mxu0 0.0
    %1394 = vmatpush1.msra.mxu0 %v1366
    %1395 = vmatprep.subr.mxu0 0.0
    %1396 = vmatpush1.msra.mxu0 %v1367
    %1397 = vmatprep.subr.mxu0 0.0
    %1398 = vmatpush1.msra.mxu0 %v1368
    %1399 = vmatprep.subr.mxu0 0.0
    %1400 = vmatpush1.msra.mxu0 %v1369
    %1401 = vmatprep.subr.mxu0 0.0
    %1402 = vmatpush1.msra.mxu0 %v1370
    %1403 = vmatprep.subr.mxu0 0.0
    %1404 = vmatpush1.msra.mxu0 %v1371
    %1405 = vmatprep.subr.mxu0 0.0
    %1406 = vmatpush1.msra.mxu0 %v1372
    %1407 = vmatprep.subr.mxu0 0.0
    %1408 = vmatpush1.msra.mxu0 %v1373
    %1409 = vmatprep.subr.mxu0 0.0
    %1410 = vmatpush1.msra.mxu0 %v1374
    %1411 = vmatprep.subr.mxu0 0.0
    %1412 = vmatpush1.msra.mxu0 %v1375
    %1413 = vmatprep.subr.mxu0 0.0
    %1414 = vmatpush1.msra.mxu0 %v1376
    %1415 = vmatprep.subr.mxu0 0.0
    %1416 = vmatpush1.msra.mxu0 %v1377
    %1417 = vmatprep.subr.mxu0 0.0
    %1418 = vmatpush1.msra.mxu0 0.0
    %1419 = vmatprep.subr.mxu0 0.0
    %1420 = vmatpush1.msra.mxu0 0.0
    %1421 = vmatprep.subr.mxu0 0.0
    %1422 = vmatpush1.msra.mxu0 0.0
    %1423 = vmatprep.subr.mxu0 0.0
    %1424 = vmatpush1.msra.mxu0 0.0
    %1425 = vmatprep.subr.mxu0 0.0
    %1426 = vmatpush1.msra.mxu0 0.0
    %1427 = vmatprep.subr.mxu0 0.0
    %1428 = vmatpush1.msra.mxu0 0.0
    %1429 = vmatprep.subr.mxu0 0.0
    %1430 = vmatpush1.msra.mxu0 0.0
    %1431 = vmatprep.subr.mxu0 0.0
    %1432 = vmatpush1.msra.mxu0 0.0
    %1433 = vmatprep.subr.mxu0 0.0
    %1434 = vmatpush1.msra.mxu0 0.0
    %1435 = vmatprep.subr.mxu0 0.0
    %1436 = vmatpush1.msra.mxu0 0.0
    %1437 = vmatprep.subr.mxu0 0.0
    %1438 = vmatpush1.msra.mxu0 0.0
    %1439 = vmatprep.subr.mxu0 0.0
    %1440 = vmatpush1.msra.mxu0 0.0
    %1441 = vmatprep.subr.mxu0 0.0
    %1442 = vmatpush1.msra.mxu0 0.0
    %1443 = vmatprep.subr.mxu0 0.0
    %1444 = vmatpush1.msra.mxu0 0.0
    %1445 = vmatprep.subr.mxu0 0.0
    %1446 = vmatpush1.msra.mxu0 0.0
    %1447 = vmatprep.subr.mxu0 0.0
    %1448 = vmatpush1.msra.mxu0 0.0
    %1449 = vmatprep.mubr.f32.mxu0 0.0
    %1450 = vmatmul.mubr.f32.gmra.mrb[0].mxu0 %v1346
    %v1451 = vpop.f32.mrb[0].mxu0
    %v1452 = vadd.f32 %v1383, %v1451
    %v1453 = vpop.f32.mrb[0].mxu0
    %1454 = vmatprep.mubr.f32.mxu0 0.0
    %1455 = vmatmul.mubr.f32.gmra.mrb[0].mxu0 %v1347
    %v1456 = vpop.f32.mrb[0].mxu0
    %v1457 = vadd.f32 %v1383, %v1456
    %v1458 = vpop.f32.mrb[0].mxu0
    %1459 = vmatprep.mubr.f32.mxu0 0.0
    %1460 = vmatmul.mubr.f32.gmra.mrb[0].mxu0 %v1348
    %v1461 = vpop.f32.mrb[0].mxu0
    %v1462 = vadd.f32 %v1383, %v1461
    %v1463 = vpop.f32.mrb[0].mxu0
    %1464 = vmatprep.mubr.f32.mxu0 0.0
    %1465 = vmatmul.mubr.f32.gmra.mrb[0].mxu0 %v1349
    %v1466 = vpop.f32.mrb[0].mxu0
    %v1467 = vadd.f32 %v1383, %v1466
    %v1468 = vpop.f32.mrb[0].mxu0
    %1469 = vmatprep.mubr.f32.mxu0 0.0
    %1470 = vmatmul.mubr.f32.gmra.mrb[0].mxu0 %v1350
    %v1471 = vpop.f32.mrb[0].mxu0
    %v1472 = vadd.f32 %v1383, %v1471
    %v1473 = vpop.f32.mrb[0].mxu0
    %1474 = vmatprep.mubr.f32.mxu0 0.0
    %1475 = vmatmul.mubr.f32.gmra.mrb[0].mxu0 %v1351
    %v1476 = vpop.f32.mrb[0].mxu0
    %v1477 = vadd.f32 %v1383, %v1476
    %v1478 = vpop.f32.mrb[0].mxu0
    %1479 = vmatprep.mubr.f32.mxu0 0.0
    %1480 = vmatmul.mubr.f32.gmra.mrb[0].mxu0 %v1352
    %v1481 = vpop.f32.mrb[0].mxu0
    %v1482 = vadd.f32 %v1383, %v1481
    %v1483 = vpop.f32.mrb[0].mxu0
    %1484 = vmatprep.mubr.f32.mxu0 0.0
    %1485 = vmatmul.mubr.f32.gmra.mrb[0].mxu0 %v1353
    %v1486 = vpop.f32.mrb[0].mxu0
    %v1487 = vadd.f32 %v1383, %v1486
    %v1488 = vpop.f32.mrb[0].mxu0
    %1489 = vmatprep.mubr.f32.mxu0 0.0
    %1490 = vmatmul.mubr.f32.gmra.mrb[0].mxu0 %v1354
    %v1491 = vpop.f32.mrb[0].mxu0
    %v1492 = vadd.f32 %v1383, %v1491
    %v1493 = vpop.f32.mrb[0].mxu0
    %1494 = vmatprep.mubr.f32.mxu0 0.0
    %1495 = vmatmul.mubr.f32.gmra.mrb[0].mxu0 %v1355
    %v1496 = vpop.f32.mrb[0].mxu0
    %v1497 = vadd.f32 %v1383, %v1496
    %v1498 = vpop.f32.mrb[0].mxu0
    %1499 = vmatprep.mubr.f32.mxu0 0.0
    %1500 = vmatmul.mubr.f32.gmra.mrb[0].mxu0 %v1356
    %v1501 = vpop.f32.mrb[0].mxu0
    %v1502 = vadd.f32 %v1383, %v1501
    %v1503 = vpop.f32.mrb[0].mxu0
    %1504 = vmatprep.mubr.f32.mxu0 0.0
    %1505 = vmatmul.mubr.f32.gmra.mrb[0].mxu0 %v1357
    %v1506 = vpop.f32.mrb[0].mxu0
    %v1507 = vadd.f32 %v1383, %v1506
    %v1508 = vpop.f32.mrb[0].mxu0
    %1509 = vmatprep.mubr.f32.mxu0 0.0
    %1510 = vmatmul.mubr.f32.gmra.mrb[0].mxu0 %v1358
    %v1511 = vpop.f32.mrb[0].mxu0
    %v1512 = vadd.f32 %v1383, %v1511
    %v1513 = vpop.f32.mrb[0].mxu0
    %1514 = vmatprep.mubr.f32.mxu0 0.0
    %1515 = vmatmul.mubr.f32.gmra.mrb[0].mxu0 %v1359
    %v1516 = vpop.f32.mrb[0].mxu0
    %v1517 = vadd.f32 %v1383, %v1516
    %v1518 = vpop.f32.mrb[0].mxu0
    %1519 = vmatprep.mubr.f32.mxu0 0.0
    %1520 = vmatmul.mubr.f32.gmra.mrb[0].mxu0 %v1360
    %v1521 = vpop.f32.mrb[0].mxu0
    %v1522 = vadd.f32 %v1383, %v1521
    %v1523 = vpop.f32.mrb[0].mxu0
    %1524 = vmatprep.mubr.f32.mxu0 0.0
    %1525 = vmatmul.mubr.f32.gmra.mrb[0].mxu0 %v1361
    %v1526 = vpop.f32.mrb[0].mxu0
    %v1527 = vadd.f32 %v1383, %v1526
    %v1528 = vpop.f32.mrb[0].mxu0
    %1529 = vdwg.mxu0
    %v1530 = vmax.f32 %v1452, 0.0
    %v1531 = vmax.f32 %v1457, 0.0
    %v1532 = vmax.f32 %v1462, 0.0
    %v1533 = vmax.f32 %v1467, 0.0
    %v1534 = vmax.f32 %v1472, 0.0
    %v1535 = vmax.f32 %v1477, 0.0
    %v1536 = vmax.f32 %v1482, 0.0
    %v1537 = vmax.f32 %v1487, 0.0
    %v1538 = vmax.f32 %v1492, 0.0
    %v1539 = vmax.f32 %v1497, 0.0
    %v1540 = vmax.f32 %v1502, 0.0
    %v1541 = vmax.f32 %v1507, 0.0
    %v1542 = vmax.f32 %v1512, 0.0
    %v1543 = vmax.f32 %v1517, 0.0
    %v1544 = vmax.f32 %v1522, 0.0
    %v1545 = vmax.f32 %v1527, 0.0
    %v1546 = vld [vmem:[%s5] sm:$0xff]
    %v1547 = vld [vmem:[%s5 + $0x8] sm:$0xff]
    %v1548 = vld [vmem:[%s5 + $0x10] sm:$0xff]
    %v1549 = vld [vmem:[%s5 + $0x18] sm:$0xff]
    %v1550 = vld [vmem:[%s5 + $0x20] sm:$0xff]
    %v1551 = vld [vmem:[%s5 + $0x28] sm:$0xff]
    %v1552 = vld [vmem:[%s5 + $0x30] sm:$0xff]
    %v1553 = vld [vmem:[%s5 + $0x38] sm:$0xff]
    %v1554 = vld [vmem:[%s6] sm:$0x1]
    %v1556 = vlaneseq
    %v1557 = vshrl.u32 %v1556, 7
    %v1558 = vsub.s32 0, %v1557
    %v1559 = vrot.slane %v1554, %v1558
    %vm1561 = vcmask 523264
    %v1563 = vsel %vm1561, %v1530, 0
    %v1566 = vsel %vm1561, %v1531, 0
    %v1569 = vsel %vm1561, %v1532, 0
    %v1572 = vsel %vm1561, %v1533, 0
    %v1575 = vsel %vm1561, %v1534, 0
    %v1578 = vsel %vm1561, %v1535, 0
    %v1581 = vsel %vm1561, %v1536, 0
    %v1584 = vsel %vm1561, %v1537, 0
    %v1587 = vsel %vm1561, %v1538, 0
    %v1590 = vsel %vm1561, %v1539, 0
    %v1593 = vsel %vm1561, %v1540, 0
    %v1596 = vsel %vm1561, %v1541, 0
    %v1599 = vsel %vm1561, %v1542, 0
    %v1602 = vsel %vm1561, %v1543, 0
    %v1605 = vsel %vm1561, %v1544, 0
    %v1608 = vsel %vm1561, %v1545, 0
    %1610 = vmatprep.subr.mxu0 0.0
    %1611 = vmatpush1.msra.mxu0 %v1546
    %1612 = vmatprep.subr.mxu0 0.0
    %1613 = vmatpush1.msra.mxu0 %v1547
    %1614 = vmatprep.subr.mxu0 0.0
    %1615 = vmatpush1.msra.mxu0 %v1548
    %1616 = vmatprep.subr.mxu0 0.0
    %1617 = vmatpush1.msra.mxu0 %v1549
    %1618 = vmatprep.subr.mxu0 0.0
    %1619 = vmatpush1.msra.mxu0 %v1550
    %1620 = vmatprep.subr.mxu0 0.0
    %1621 = vmatpush1.msra.mxu0 %v1551
    %1622 = vmatprep.subr.mxu0 0.0
    %1623 = vmatpush1.msra.mxu0 %v1552
    %1624 = vmatprep.subr.mxu0 0.0
    %1625 = vmatpush1.msra.mxu0 %v1553
    %1626 = vmatprep.subr.mxu0 0.0
    %1627 = vmatpush1.msra.mxu0 0.0
    %1628 = vmatprep.subr.mxu0 0.0
    %1629 = vmatpush1.msra.mxu0 0.0
    %1630 = vmatprep.subr.mxu0 0.0
    %1631 = vmatpush1.msra.mxu0 0.0
    %1632 = vmatprep.subr.mxu0 0.0
    %1633 = vmatpush1.msra.mxu0 0.0
    %1634 = vmatprep.subr.mxu0 0.0
    %1635 = vmatpush1.msra.mxu0 0.0
    %1636 = vmatprep.subr.mxu0 0.0
    %1637 = vmatpush1.msra.mxu0 0.0
    %1638 = vmatprep.subr.mxu0 0.0
    %1639 = vmatpush1.msra.mxu0 0.0
    %1640 = vmatprep.subr.mxu0 0.0
    %1641 = vmatpush1.msra.mxu0 0.0
    %1642 = vmatprep.subr.mxu0 0.0
    %1643 = vmatpush1.msra.mxu0 0.0
    %1644 = vmatprep.subr.mxu0 0.0
    %1645 = vmatpush1.msra.mxu0 0.0
    %1646 = vmatprep.subr.mxu0 0.0
    %1647 = vmatpush1.msra.mxu0 0.0
    %1648 = vmatprep.subr.mxu0 0.0
    %1649 = vmatpush1.msra.mxu0 0.0
    %1650 = vmatprep.subr.mxu0 0.0
    %1651 = vmatpush1.msra.mxu0 0.0
    %1652 = vmatprep.subr.mxu0 0.0
    %1653 = vmatpush1.msra.mxu0 0.0
    %1654 = vmatprep.subr.mxu0 0.0
    %1655 = vmatpush1.msra.mxu0 0.0
    %1656 = vmatprep.subr.mxu0 0.0
    %1657 = vmatpush1.msra.mxu0 0.0
    %1658 = vmatprep.subr.mxu0 0.0
    %1659 = vmatpush1.msra.mxu0 0.0
    %1660 = vmatprep.subr.mxu0 0.0
    %1661 = vmatpush1.msra.mxu0 0.0
    %1662 = vmatprep.subr.mxu0 0.0
    %1663 = vmatpush1.msra.mxu0 0.0
    %1664 = vmatprep.subr.mxu0 0.0
    %1665 = vmatpush1.msra.mxu0 0.0
    %1666 = vmatprep.subr.mxu0 0.0
    %1667 = vmatpush1.msra.mxu0 0.0
    %1668 = vmatprep.subr.mxu0 0.0
    %1669 = vmatpush1.msra.mxu0 0.0
    %1670 = vmatprep.subr.mxu0 0.0
    %1671 = vmatpush1.msra.mxu0 0.0
    %1672 = vmatprep.subr.mxu0 0.0
    %1673 = vmatpush1.msra.mxu0 0.0
    %1674 = vmatprep.mubr.f32.mxu0 0.0
    %1675 = vmatmul.mubr.f32.gmra.mrb[0].mxu0 %v1563
    %v1676 = vpop.f32.mrb[0].mxu0
    %v1677 = vadd.f32 %v1559, %v1676
    %v1678 = vpop.f32.mrb[0].mxu0
    %1679 = vmatprep.mubr.f32.mxu0 0.0
    %1680 = vmatmul.mubr.f32.gmra.mrb[0].mxu0 %v1566
    %v1681 = vpop.f32.mrb[0].mxu0
    %v1682 = vadd.f32 %v1559, %v1681
    %v1683 = vpop.f32.mrb[0].mxu0
    %1684 = vmatprep.mubr.f32.mxu0 0.0
    %1685 = vmatmul.mubr.f32.gmra.mrb[0].mxu0 %v1569
    %v1686 = vpop.f32.mrb[0].mxu0
    %v1687 = vadd.f32 %v1559, %v1686
    %v1688 = vpop.f32.mrb[0].mxu0
    %1689 = vmatprep.mubr.f32.mxu0 0.0
    %1690 = vmatmul.mubr.f32.gmra.mrb[0].mxu0 %v1572
    %v1691 = vpop.f32.mrb[0].mxu0
    %v1692 = vadd.f32 %v1559, %v1691
    %v1693 = vpop.f32.mrb[0].mxu0
    %1694 = vmatprep.mubr.f32.mxu0 0.0
    %1695 = vmatmul.mubr.f32.gmra.mrb[0].mxu0 %v1575
    %v1696 = vpop.f32.mrb[0].mxu0
    %v1697 = vadd.f32 %v1559, %v1696
    %v1698 = vpop.f32.mrb[0].mxu0
    %1699 = vmatprep.mubr.f32.mxu0 0.0
    %1700 = vmatmul.mubr.f32.gmra.mrb[0].mxu0 %v1578
    %v1701 = vpop.f32.mrb[0].mxu0
    %v1702 = vadd.f32 %v1559, %v1701
    %v1703 = vpop.f32.mrb[0].mxu0
    %1704 = vmatprep.mubr.f32.mxu0 0.0
    %1705 = vmatmul.mubr.f32.gmra.mrb[0].mxu0 %v1581
    %v1706 = vpop.f32.mrb[0].mxu0
    %v1707 = vadd.f32 %v1559, %v1706
    %v1708 = vpop.f32.mrb[0].mxu0
    %1709 = vmatprep.mubr.f32.mxu0 0.0
    %1710 = vmatmul.mubr.f32.gmra.mrb[0].mxu0 %v1584
    %v1711 = vpop.f32.mrb[0].mxu0
    %v1712 = vadd.f32 %v1559, %v1711
    %v1713 = vpop.f32.mrb[0].mxu0
    %1714 = vmatprep.mubr.f32.mxu0 0.0
    %1715 = vmatmul.mubr.f32.gmra.mrb[0].mxu0 %v1587
    %v1716 = vpop.f32.mrb[0].mxu0
    %v1717 = vadd.f32 %v1559, %v1716
    %v1718 = vpop.f32.mrb[0].mxu0
    %1719 = vmatprep.mubr.f32.mxu0 0.0
    %1720 = vmatmul.mubr.f32.gmra.mrb[0].mxu0 %v1590
    %v1721 = vpop.f32.mrb[0].mxu0
    %v1722 = vadd.f32 %v1559, %v1721
    %v1723 = vpop.f32.mrb[0].mxu0
    %1724 = vmatprep.mubr.f32.mxu0 0.0
    %1725 = vmatmul.mubr.f32.gmra.mrb[0].mxu0 %v1593
    %v1726 = vpop.f32.mrb[0].mxu0
    %v1727 = vadd.f32 %v1559, %v1726
    %v1728 = vpop.f32.mrb[0].mxu0
    %1729 = vmatprep.mubr.f32.mxu0 0.0
    %1730 = vmatmul.mubr.f32.gmra.mrb[0].mxu0 %v1596
    %v1731 = vpop.f32.mrb[0].mxu0
    %v1732 = vadd.f32 %v1559, %v1731
    %v1733 = vpop.f32.mrb[0].mxu0
    %1734 = vmatprep.mubr.f32.mxu0 0.0
    %1735 = vmatmul.mubr.f32.gmra.mrb[0].mxu0 %v1599
    %v1736 = vpop.f32.mrb[0].mxu0
    %v1737 = vadd.f32 %v1559, %v1736
    %v1738 = vpop.f32.mrb[0].mxu0
    %1739 = vmatprep.mubr.f32.mxu0 0.0
    %1740 = vmatmul.mubr.f32.gmra.mrb[0].mxu0 %v1602
    %v1741 = vpop.f32.mrb[0].mxu0
    %v1742 = vadd.f32 %v1559, %v1741
    %v1743 = vpop.f32.mrb[0].mxu0
    %1744 = vmatprep.mubr.f32.mxu0 0.0
    %1745 = vmatmul.mubr.f32.gmra.mrb[0].mxu0 %v1605
    %v1746 = vpop.f32.mrb[0].mxu0
    %v1747 = vadd.f32 %v1559, %v1746
    %v1748 = vpop.f32.mrb[0].mxu0
    %1749 = vmatprep.mubr.f32.mxu0 0.0
    %1750 = vmatmul.mubr.f32.gmra.mrb[0].mxu0 %v1608
    %v1751 = vpop.f32.mrb[0].mxu0
    %v1752 = vadd.f32 %v1559, %v1751
    %v1753 = vpop.f32.mrb[0].mxu0
    %1754 = vdwg.mxu0
    %vm1755 = vcmask 31744
    %v1756 = vsel %vm1755, %v1677, -inf
    %1757 = vmax.xlane.f32.xlu0 %v1756
    %v1758 = vpop.xlane.xlu0 %1757
    %v1759 = vsel %vm1755, %v1682, -inf
    %1760 = vmax.xlane.f32.xlu0 %v1759
    %v1761 = vpop.xlane.xlu0 %1760
    %v1762 = vsel %vm1755, %v1687, -inf
    %1763 = vmax.xlane.f32.xlu0 %v1762
    %v1764 = vpop.xlane.xlu0 %1763
    %v1765 = vsel %vm1755, %v1692, -inf
    %1766 = vmax.xlane.f32.xlu0 %v1765
    %v1767 = vpop.xlane.xlu0 %1766
    %v1768 = vsel %vm1755, %v1697, -inf
    %1769 = vmax.xlane.f32.xlu0 %v1768
    %v1770 = vpop.xlane.xlu0 %1769
    %v1771 = vsel %vm1755, %v1702, -inf
    %1772 = vmax.xlane.f32.xlu0 %v1771
    %v1773 = vpop.xlane.xlu0 %1772
    %v1774 = vsel %vm1755, %v1707, -inf
    %1775 = vmax.xlane.f32.xlu0 %v1774
    %v1776 = vpop.xlane.xlu0 %1775
    %v1777 = vsel %vm1755, %v1712, -inf
    %1778 = vmax.xlane.f32.xlu0 %v1777
    %v1779 = vpop.xlane.xlu0 %1778
    %v1780 = vsel %vm1755, %v1717, -inf
    %1781 = vmax.xlane.f32.xlu0 %v1780
    %v1782 = vpop.xlane.xlu0 %1781
    %v1783 = vsel %vm1755, %v1722, -inf
    %1784 = vmax.xlane.f32.xlu0 %v1783
    %v1785 = vpop.xlane.xlu0 %1784
    %v1786 = vsel %vm1755, %v1727, -inf
    %1787 = vmax.xlane.f32.xlu0 %v1786
    %v1788 = vpop.xlane.xlu0 %1787
    %v1789 = vsel %vm1755, %v1732, -inf
    %1790 = vmax.xlane.f32.xlu0 %v1789
    %v1791 = vpop.xlane.xlu0 %1790
    %v1792 = vsel %vm1755, %v1737, -inf
    %1793 = vmax.xlane.f32.xlu0 %v1792
    %v1794 = vpop.xlane.xlu0 %1793
    %v1795 = vsel %vm1755, %v1742, -inf
    %1796 = vmax.xlane.f32.xlu0 %v1795
    %v1797 = vpop.xlane.xlu0 %1796
    %v1798 = vsel %vm1755, %v1747, -inf
    %1799 = vmax.xlane.f32.xlu0 %v1798
    %v1800 = vpop.xlane.xlu0 %1799
    %v1801 = vsel %vm1755, %v1752, -inf
    %1802 = vmax.xlane.f32.xlu0 %v1801
    %v1803 = vpop.xlane.xlu0 %1802
    %v1804 = vsub.f32 %v1677, %v1758
    %v1805 = vsub.f32 %v1682, %v1761
    %v1806 = vsub.f32 %v1687, %v1764
    %v1807 = vsub.f32 %v1692, %v1767
    %v1808 = vsub.f32 %v1697, %v1770
    %v1809 = vsub.f32 %v1702, %v1773
    %v1810 = vsub.f32 %v1707, %v1776
    %v1811 = vsub.f32 %v1712, %v1779
    %v1812 = vsub.f32 %v1717, %v1782
    %v1813 = vsub.f32 %v1722, %v1785
    %v1814 = vsub.f32 %v1727, %v1788
    %v1815 = vsub.f32 %v1732, %v1791
    %v1816 = vsub.f32 %v1737, %v1794
    %v1817 = vsub.f32 %v1742, %v1797
    %v1818 = vsub.f32 %v1747, %v1800
    %v1819 = vsub.f32 %v1752, %v1803
    %v1820 = vmul.f32 %v1804, 1.442695
    %v1821 = vpow.pop %v1820
    %v1822 = vmul.f32 %v1805, 1.442695
    %v1823 = vpow.pop %v1822
    %v1824 = vmul.f32 %v1806, 1.442695
    %v1825 = vpow.pop %v1824
    %v1826 = vmul.f32 %v1807, 1.442695
    %v1827 = vpow.pop %v1826
    %v1828 = vmul.f32 %v1808, 1.442695
    %v1829 = vpow.pop %v1828
    %v1830 = vmul.f32 %v1809, 1.442695
    %v1831 = vpow.pop %v1830
    %v1832 = vmul.f32 %v1810, 1.442695
    %v1833 = vpow.pop %v1832
    %v1834 = vmul.f32 %v1811, 1.442695
    %v1835 = vpow.pop %v1834
    %v1836 = vmul.f32 %v1812, 1.442695
    %v1837 = vpow.pop %v1836
    %v1838 = vmul.f32 %v1813, 1.442695
    %v1839 = vpow.pop %v1838
    %v1840 = vmul.f32 %v1814, 1.442695
    %v1841 = vpow.pop %v1840
    %v1842 = vmul.f32 %v1815, 1.442695
    %v1843 = vpow.pop %v1842
    %v1844 = vmul.f32 %v1816, 1.442695
    %v1845 = vpow.pop %v1844
    %v1846 = vmul.f32 %v1817, 1.442695
    %v1847 = vpow.pop %v1846
    %v1848 = vmul.f32 %v1818, 1.442695
    %v1849 = vpow.pop %v1848
    %v1850 = vmul.f32 %v1819, 1.442695
    %v1851 = vpow.pop %v1850
    %v1852 = vsel %vm1755, %v1821, 0.0
    %1853 = vadd.xlane.f32.xlu0 %v1852
    %v1854 = vpop.xlane.xlu0 %1853
    %v1855 = vsel %vm1755, %v1823, 0.0
    %1856 = vadd.xlane.f32.xlu0 %v1855
    %v1857 = vpop.xlane.xlu0 %1856
    %v1858 = vsel %vm1755, %v1825, 0.0
    %1859 = vadd.xlane.f32.xlu0 %v1858
    %v1860 = vpop.xlane.xlu0 %1859
    %v1861 = vsel %vm1755, %v1827, 0.0
    %1862 = vadd.xlane.f32.xlu0 %v1861
    %v1863 = vpop.xlane.xlu0 %1862
    %v1864 = vsel %vm1755, %v1829, 0.0
    %1865 = vadd.xlane.f32.xlu0 %v1864
    %v1866 = vpop.xlane.xlu0 %1865
    %v1867 = vsel %vm1755, %v1831, 0.0
    %1868 = vadd.xlane.f32.xlu0 %v1867
    %v1869 = vpop.xlane.xlu0 %1868
    %v1870 = vsel %vm1755, %v1833, 0.0
    %1871 = vadd.xlane.f32.xlu0 %v1870
    %v1872 = vpop.xlane.xlu0 %1871
    %v1873 = vsel %vm1755, %v1835, 0.0
    %1874 = vadd.xlane.f32.xlu0 %v1873
    %v1875 = vpop.xlane.xlu0 %1874
    %v1876 = vsel %vm1755, %v1837, 0.0
    %1877 = vadd.xlane.f32.xlu0 %v1876
    %v1878 = vpop.xlane.xlu0 %1877
    %v1879 = vsel %vm1755, %v1839, 0.0
    %1880 = vadd.xlane.f32.xlu0 %v1879
    %v1881 = vpop.xlane.xlu0 %1880
    %v1882 = vsel %vm1755, %v1841, 0.0
    %1883 = vadd.xlane.f32.xlu0 %v1882
    %v1884 = vpop.xlane.xlu0 %1883
    %v1885 = vsel %vm1755, %v1843, 0.0
    %1886 = vadd.xlane.f32.xlu0 %v1885
    %v1887 = vpop.xlane.xlu0 %1886
    %v1888 = vsel %vm1755, %v1845, 0.0
    %1889 = vadd.xlane.f32.xlu0 %v1888
    %v1890 = vpop.xlane.xlu0 %1889
    %v1891 = vsel %vm1755, %v1847, 0.0
    %1892 = vadd.xlane.f32.xlu0 %v1891
    %v1893 = vpop.xlane.xlu0 %1892
    %v1894 = vsel %vm1755, %v1849, 0.0
    %1895 = vadd.xlane.f32.xlu0 %v1894
    %v1896 = vpop.xlane.xlu0 %1895
    %v1897 = vsel %vm1755, %v1851, 0.0
    %1898 = vadd.xlane.f32.xlu0 %v1897
    %v1899 = vpop.xlane.xlu0 %1898
    %v1900 = vlog2.pop %v1854
    %v1901 = vmul.f32 %v1900, 0.6931472
    %v1902 = vlog2.pop %v1857
    %v1903 = vmul.f32 %v1902, 0.6931472
    %v1904 = vlog2.pop %v1860
    %v1905 = vmul.f32 %v1904, 0.6931472
    %v1906 = vlog2.pop %v1863
    %v1907 = vmul.f32 %v1906, 0.6931472
    %v1908 = vlog2.pop %v1866
    %v1909 = vmul.f32 %v1908, 0.6931472
    %v1910 = vlog2.pop %v1869
    %v1911 = vmul.f32 %v1910, 0.6931472
    %v1912 = vlog2.pop %v1872
    %v1913 = vmul.f32 %v1912, 0.6931472
    %v1914 = vlog2.pop %v1875
    %v1915 = vmul.f32 %v1914, 0.6931472
    %v1916 = vlog2.pop %v1878
    %v1917 = vmul.f32 %v1916, 0.6931472
    %v1918 = vlog2.pop %v1881
    %v1919 = vmul.f32 %v1918, 0.6931472
    %v1920 = vlog2.pop %v1884
    %v1921 = vmul.f32 %v1920, 0.6931472
    %v1922 = vlog2.pop %v1887
    %v1923 = vmul.f32 %v1922, 0.6931472
    %v1924 = vlog2.pop %v1890
    %v1925 = vmul.f32 %v1924, 0.6931472
    %v1926 = vlog2.pop %v1893
    %v1927 = vmul.f32 %v1926, 0.6931472
    %v1928 = vlog2.pop %v1896
    %v1929 = vmul.f32 %v1928, 0.6931472
    %v1930 = vlog2.pop %v1899
    %v1931 = vmul.f32 %v1930, 0.6931472
    %v1932 = vsub.f32 %v1804, %v1901
    %v1933 = vsub.f32 %v1805, %v1903
    %v1934 = vsub.f32 %v1806, %v1905
    %v1935 = vsub.f32 %v1807, %v1907
    %v1936 = vsub.f32 %v1808, %v1909
    %v1937 = vsub.f32 %v1809, %v1911
    %v1938 = vsub.f32 %v1810, %v1913
    %v1939 = vsub.f32 %v1811, %v1915
    %v1940 = vsub.f32 %v1812, %v1917
    %v1941 = vsub.f32 %v1813, %v1919
    %v1942 = vsub.f32 %v1814, %v1921
    %v1943 = vsub.f32 %v1815, %v1923
    %v1944 = vsub.f32 %v1816, %v1925
    %v1945 = vsub.f32 %v1817, %v1927
    %v1946 = vsub.f32 %v1818, %v1929
    %v1947 = vsub.f32 %v1819, %v1931
    %1948 = vst.msk [vmem:[%s7] sm:$0xff] %vm1755, %v1932
    %1949 = vst.msk [vmem:[%s7 + $0x8] sm:$0xff] %vm1755, %v1933
    %1950 = vst.msk [vmem:[%s7 + $0x10] sm:$0xff] %vm1755, %v1934
    %1951 = vst.msk [vmem:[%s7 + $0x18] sm:$0xff] %vm1755, %v1935
    %1952 = vst.msk [vmem:[%s7 + $0x20] sm:$0xff] %vm1755, %v1936
    %1953 = vst.msk [vmem:[%s7 + $0x28] sm:$0xff] %vm1755, %v1937
    %1954 = vst.msk [vmem:[%s7 + $0x30] sm:$0xff] %vm1755, %v1938
    %1955 = vst.msk [vmem:[%s7 + $0x38] sm:$0xff] %vm1755, %v1939
    %1956 = vst.msk [vmem:[%s7 + $0x40] sm:$0xff] %vm1755, %v1940
    %1957 = vst.msk [vmem:[%s7 + $0x48] sm:$0xff] %vm1755, %v1941
    %1958 = vst.msk [vmem:[%s7 + $0x50] sm:$0xff] %vm1755, %v1942
    %1959 = vst.msk [vmem:[%s7 + $0x58] sm:$0xff] %vm1755, %v1943
    %1960 = vst.msk [vmem:[%s7 + $0x60] sm:$0xff] %vm1755, %v1944
    %1961 = vst.msk [vmem:[%s7 + $0x68] sm:$0xff] %vm1755, %v1945
    %1962 = vst.msk [vmem:[%s7 + $0x70] sm:$0xff] %vm1755, %v1946
    %1963 = vst.msk [vmem:[%s7 + $0x78] sm:$0xff] %vm1755, %v1947
    // Predicated region
    $region38: #{tpu_custom_call.1} parent=1 // pred_check
      _
    $region39: #{tpu_custom_call.1} parent=1 // pred_check_branch
      %1965 = sbr.rel (0) target = $region41
    $region40: #{tpu_custom_call.1} parent=1 // pred_region
      _
    $region41: #{tpu_custom_call.1} parent=1 // pred_fallthru
      _
    // Predicated region
    $region42: #{tpu_custom_call.1} parent=1 // pred_check
      _
    $region43: #{tpu_custom_call.1} parent=1 // pred_check_branch
      %1967 = sbr.rel (0) target = $region45
    $region44: #{tpu_custom_call.1} parent=1 // pred_region
      _
    $region45: #{tpu_custom_call.1} parent=1 // pred_fallthru
      _
    %1968 = vsyncpa [#allocation3], 1
    %1969 = vsyncpa [#allocation5], 1

</llo_original>
